<compile_context>
chip_gen: v7x
topology: tpu7x:2x2x1
jax: 0.10.0
libtpu: 0.0.40
codegen_flags: <defaults>
</compile_context>

<pallas_src>
import jax
import jax.numpy as jnp
from jax.experimental import pallas as pl
from jax.experimental.pallas import tpu as pltpu  # noqa: F401  (TPU backend)

CPAD = 128  # lane-padded channel width


# ----------------------------- Pallas kernels ------------------------------

def conv_bn_lrelu_kernel(p_ref, w_ref, aff_ref, o_ref):
    """im2col-matmul conv + BatchNorm2d (batch stats) + LeakyReLU(0.2).

    p_ref:   (M, K)      bf16 im2col patches
    w_ref:   (K, CPAD)   bf16 reshaped conv weight (zero-padded lanes)
    aff_ref: (3, CPAD)   f32  [bias; gamma; beta]  (gamma=beta=0 on pad lanes)
    o_ref:   (M, CPAD)   f32  activations
    """
    inv_m = 1.0 / p_ref.shape[0]
    y = jnp.dot(p_ref[...], w_ref[...], preferred_element_type=jnp.float32)
    y = y + aff_ref[0:1, :]
    # One-pass batch stats (biased variance), eps = 1e-5 (PyTorch default).
    mean = jnp.sum(y, axis=0, keepdims=True) * inv_m
    var = jnp.maximum(jnp.sum(y * y, axis=0, keepdims=True) * inv_m - mean * mean, 0.0)
    scale = aff_ref[1:2, :] * jax.lax.rsqrt(var + 1e-5)
    shift = aff_ref[2:3, :] - mean * scale
    z = y * scale + shift
    o_ref[...] = jnp.where(z > 0, z, 0.2 * z)


def conv_bn_lrelu_linear_kernel(p_ref, w_ref, aff_ref, wl_ref, o_ref):
    """Block-3 variant: conv + BN + LeakyReLU, then fused Linear(64 -> 1).

    aff_ref: (4, CPAD) f32 [bias; gamma; beta; linear-bias row (col 0)]
    wl_ref:  (CPAD, CPAD) bf16 linear weight (real block is rows 0:64, col 0)
    o_ref:   (M, CPAD) f32 (real logit in column 0)
    """
    inv_m = 1.0 / p_ref.shape[0]
    y = jnp.dot(p_ref[...], w_ref[...], preferred_element_type=jnp.float32)
    y = y + aff_ref[0:1, :]
    mean = jnp.sum(y, axis=0, keepdims=True) * inv_m
    var = jnp.maximum(jnp.sum(y * y, axis=0, keepdims=True) * inv_m - mean * mean, 0.0)
    scale = aff_ref[1:2, :] * jax.lax.rsqrt(var + 1e-5)
    shift = aff_ref[2:3, :] - mean * scale
    z = y * scale + shift
    a = jnp.where(z > 0, z, 0.2 * z)
    o_ref[...] = (jnp.dot(a.astype(wl_ref.dtype), wl_ref[...],
                          preferred_element_type=jnp.float32)
                  + aff_ref[3:4, :])


# ------------------------------- JAX glue ----------------------------------

def im2col_nhwc(x, kh, kw, stride):
    """x: (N, H, W, C) NHWC -> patches (N*Ho*Wo, kh*kw*C), K-order (kh, kw, c)."""
    N, H, W, C = x.shape
    Ho = (H - kh) // stride + 1
    Wo = (W - kw) // stride + 1
    cols = [x[:, i:i + stride * Ho:stride, j:j + stride * Wo:stride, :]
            for i in range(kh) for j in range(kw)]
    patches = jnp.concatenate(cols, axis=-1).reshape(N * Ho * Wo, kh * kw * C)
    return patches, Ho, Wo


def conv_block(x_nhwc, w2, aff, kh, kw, stride, fused_linear_w=None):
    """One get_disc_block (optionally with the final Linear fused in)."""
    N = x_nhwc.shape[0]
    patches, Ho, Wo = im2col_nhwc(x_nhwc, kh, kw, stride)
    patches = patches.astype(jnp.bfloat16)
    M = patches.shape[0]
    if fused_linear_w is None:
        out = pl.pallas_call(
            conv_bn_lrelu_kernel,
            out_shape=jax.ShapeDtypeStruct((M, CPAD), jnp.float32),
        )(patches, w2, aff)
        return out.reshape(N, Ho, Wo, CPAD)          # NHWC, lane-padded channels
    out = pl.pallas_call(
        conv_bn_lrelu_linear_kernel,
        out_shape=jax.ShapeDtypeStruct((M, CPAD), jnp.float32),
    )(patches, w2, aff, fused_linear_w)
    return out                                       # (N, CPAD); logit in col 0


def discriminator_forward(images_nchw, pp):
    x = jnp.transpose(images_nchw, (0, 2, 3, 1))               # NHWC once
    x1 = conv_block(x, pp["w1"], pp["a1"], 3, 3, 2)[..., :16]  # (N,13,13,16)
    x2 = conv_block(x1, pp["w2"], pp["a2"], 5, 5, 2)[..., :32] # (N, 5, 5,32)
    x3 = conv_block(x2, pp["w3"], pp["a3"], 5, 5, 2,
                    fused_linear_w=pp["wl"])                   # (N, CPAD)
    return x3[:, :1]                                           # (N, 1)


# --------------------------- parameter handling -----------------------------

def init_params(key):
    """PyTorch-layout params with default-like uniform(-1/sqrt(fan_in), ...)."""
    ks = jax.random.split(key, 8)

    def u(k, shape, fan_in):
        bound = 1.0 / (fan_in ** 0.5)
        return jax.random.uniform(k, shape, jnp.float32, -bound, bound)

    p = {}
    p["w1"] = u(ks[0], (16, 1, 3, 3), 1 * 3 * 3)
    p["b1"] = u(ks[1], (16,), 1 * 3 * 3)
    p["w2"] = u(ks[2], (32, 16, 5, 5), 16 * 5 * 5)
    p["b2"] = u(ks[3], (32,), 16 * 5 * 5)
    p["w3"] = u(ks[4], (64, 32, 5, 5), 32 * 5 * 5)
    p["b3"] = u(ks[5], (64,), 32 * 5 * 5)
    p["g1"], p["be1"] = jnp.ones((16,), jnp.float32), jnp.zeros((16,), jnp.float32)
    p["g2"], p["be2"] = jnp.ones((32,), jnp.float32), jnp.zeros((32,), jnp.float32)
    p["g3"], p["be3"] = jnp.ones((64,), jnp.float32), jnp.zeros((64,), jnp.float32)
    p["wl"] = u(ks[6], (1, 64), 64)
    p["bl"] = u(ks[7], (1,), 64)
    return p


def _prep_conv_w(w):
    """(Cout, Cin, KH, KW) -> (KH*KW*Cin, CPAD) bf16, K-order (kh, kw, cin)."""
    cout, cin, kh, kw = w.shape
    w2 = jnp.transpose(w, (2, 3, 1, 0)).reshape(kh * kw * cin, cout)
    return jnp.pad(w2, ((0, 0), (0, CPAD - cout))).astype(jnp.bfloat16)


def _prep_affine(b, g, be):
    """Pack [bias; gamma; beta] -> (3, CPAD) f32, zeros on pad lanes."""
    cout = b.shape[0]
    a = jnp.stack([b, g, be], axis=0)
    return jnp.pad(a, ((0, 0), (0, CPAD - cout))).astype(jnp.float32)


def prepare_params(p):
    """One-time layout/padding/dtype prep (done outside the forward pass)."""
    pp = {}
    pp["w1"], pp["a1"] = _prep_conv_w(p["w1"]), _prep_affine(p["b1"], p["g1"], p["be1"])
    pp["w2"], pp["a2"] = _prep_conv_w(p["w2"]), _prep_affine(p["b2"], p["g2"], p["be2"])
    pp["w3"] = _prep_conv_w(p["w3"])
    a3 = _prep_affine(p["b3"], p["g3"], p["be3"])
    bl_row = jnp.zeros((1, CPAD), jnp.float32).at[0, 0].set(p["bl"][0])
    pp["a3"] = jnp.concatenate([a3, bl_row], axis=0)            # (4, CPAD)
    wl = jnp.zeros((CPAD, CPAD), jnp.float32).at[:64, 0].set(p["wl"][0, :])
    pp["wl"] = wl.astype(jnp.bfloat16)
    return pp


if __name__ == "__main__":
    key = jax.random.PRNGKey(0)
    k_img, k_par = jax.random.split(key)
    # 28x28 single-channel input so block_3 output is (N, 64, 1, 1),
    # matching Linear(in_features=64).
    images = jax.random.normal(k_img, (2, 1, 28, 28), dtype=jnp.float32)
    params = init_params(k_par)
    prepped = prepare_params(params)

    fwd = jax.jit(discriminator_forward)
    logits = fwd(images, prepped)
    jax.block_until_ready(logits)
    assert logits.shape == (2, 1)
    print("KERNEL_OK")
</pallas_src>

<mosaic_0001>
module attributes {stable_mosaic.version = 11 : i64} {
  func.func @conv_bn_lrelu_kernel(%arg0: memref<338x9xbf16, #tpu.memory_space<vmem>>, %arg1: memref<9x128xbf16, #tpu.memory_space<vmem>>, %arg2: memref<3x128xf32, #tpu.memory_space<vmem>>, %arg3: memref<338x128xf32, #tpu.memory_space<vmem>>) attributes {dimension_semantics = [], scalar_prefetch = 0 : i64, scratch_operands = 0 : i64, tpu.core_type = #tpu.core_type<tc>} {
    %c0 = arith.constant 0 : index
    %c0_0 = arith.constant 0 : index
    %0 = vector.load %arg0[%c0, %c0_0] : memref<338x9xbf16, #tpu.memory_space<vmem>>, vector<338x9xbf16>
    %c0_1 = arith.constant 0 : index
    %c0_2 = arith.constant 0 : index
    %1 = vector.load %arg1[%c0_1, %c0_2] : memref<9x128xbf16, #tpu.memory_space<vmem>>, vector<9x128xbf16>
    %cst = arith.constant dense<0.000000e+00> : vector<338x128xf32>
    %2 = tpu.matmul %0, %1, %cst {dimension_numbers = #tpu.dot_dimension_numbers<[1], [0], [0], [1], [0, 0, 1, 1], [], []>} : vector<338x9xbf16>, vector<9x128xbf16>, vector<338x128xf32> -> vector<338x128xf32>
    %c0_3 = arith.constant 0 : index
    %c0_4 = arith.constant 0 : index
    %3 = vector.load %arg2[%c0_3, %c0_4] : memref<3x128xf32, #tpu.memory_space<vmem>>, vector<1x128xf32>
    %4 = vector.broadcast %3 : vector<1x128xf32> to vector<338x128xf32>
    %5 = arith.addf %2, %4 : vector<338x128xf32>
    %cst_5 = arith.constant dense<0.000000e+00> : vector<128xf32>
    %6 = vector.multi_reduction <add>, %5, %cst_5 [0] : vector<338x128xf32> to vector<128xf32>
    %7 = vector.shape_cast %6 : vector<128xf32> to vector<1x128xf32>
    %cst_6 = arith.constant 2.958580e-03 : f32
    %8 = vector.broadcast %cst_6 : f32 to vector<1x128xf32>
    %9 = arith.mulf %7, %8 : vector<1x128xf32>
    %10 = arith.mulf %5, %5 : vector<338x128xf32>
    %cst_7 = arith.constant dense<0.000000e+00> : vector<128xf32>
    %11 = vector.multi_reduction <add>, %10, %cst_7 [0] : vector<338x128xf32> to vector<128xf32>
    %12 = vector.shape_cast %11 : vector<128xf32> to vector<1x128xf32>
    %cst_8 = arith.constant 2.958580e-03 : f32
    %13 = vector.broadcast %cst_8 : f32 to vector<1x128xf32>
    %14 = arith.mulf %12, %13 : vector<1x128xf32>
    %15 = arith.mulf %9, %9 : vector<1x128xf32>
    %16 = arith.subf %14, %15 : vector<1x128xf32>
    %cst_9 = arith.constant 0.000000e+00 : f32
    %17 = vector.broadcast %cst_9 : f32 to vector<1x128xf32>
    %18 = arith.maximumf %16, %17 : vector<1x128xf32>
    %c1 = arith.constant 1 : index
    %c0_10 = arith.constant 0 : index
    %19 = vector.load %arg2[%c1, %c0_10] : memref<3x128xf32, #tpu.memory_space<vmem>>, vector<1x128xf32>
    %cst_11 = arith.constant 9.99999974E-6 : f32
    %20 = vector.broadcast %cst_11 : f32 to vector<1x128xf32>
    %21 = arith.addf %18, %20 : vector<1x128xf32>
    %22 = math.rsqrt %21 : vector<1x128xf32>
    %23 = arith.mulf %19, %22 : vector<1x128xf32>
    %c2 = arith.constant 2 : index
    %c0_12 = arith.constant 0 : index
    %24 = vector.load %arg2[%c2, %c0_12] : memref<3x128xf32, #tpu.memory_space<vmem>>, vector<1x128xf32>
    %25 = arith.mulf %9, %23 : vector<1x128xf32>
    %26 = arith.subf %24, %25 : vector<1x128xf32>
    %27 = vector.broadcast %23 : vector<1x128xf32> to vector<338x128xf32>
    %28 = arith.mulf %5, %27 : vector<338x128xf32>
    %29 = vector.broadcast %26 : vector<1x128xf32> to vector<338x128xf32>
    %30 = arith.addf %28, %29 : vector<338x128xf32>
    %cst_13 = arith.constant 0.000000e+00 : f32
    %31 = vector.broadcast %cst_13 : f32 to vector<338x128xf32>
    %32 = arith.cmpf ogt, %30, %31 : vector<338x128xf32>
    %cst_14 = arith.constant 2.000000e-01 : f32
    %33 = vector.broadcast %cst_14 : f32 to vector<338x128xf32>
    %34 = arith.mulf %33, %30 : vector<338x128xf32>
    %35 = arith.select %32, %30, %34 : vector<338x128xi1>, vector<338x128xf32>
    %c0_15 = arith.constant 0 : index
    %c0_16 = arith.constant 0 : index
    %36 = vector.load %arg3[%c0_15, %c0_16] : memref<338x128xf32, #tpu.memory_space<vmem>>, vector<338x128xf32>
    tpu.vector_store %arg3[%c0_15, %c0_16], %35 {strides = array<i32>} : memref<338x128xf32, #tpu.memory_space<vmem>>, vector<338x128xf32>,
    return
  }
}

module attributes {stable_mosaic.version = 11 : i64} {
  func.func @conv_bn_lrelu_kernel(%arg0: memref<50x400xbf16, #tpu.memory_space<vmem>>, %arg1: memref<400x128xbf16, #tpu.memory_space<vmem>>, %arg2: memref<3x128xf32, #tpu.memory_space<vmem>>, %arg3: memref<50x128xf32, #tpu.memory_space<vmem>>) attributes {dimension_semantics = [], scalar_prefetch = 0 : i64, scratch_operands = 0 : i64, tpu.core_type = #tpu.core_type<tc>} {
    %c0 = arith.constant 0 : index
    %c0_0 = arith.constant 0 : index
    %0 = vector.load %arg0[%c0, %c0_0] : memref<50x400xbf16, #tpu.memory_space<vmem>>, vector<50x400xbf16>
    %c0_1 = arith.constant 0 : index
    %c0_2 = arith.constant 0 : index
    %1 = vector.load %arg1[%c0_1, %c0_2] : memref<400x128xbf16, #tpu.memory_space<vmem>>, vector<400x128xbf16>
    %cst = arith.constant dense<0.000000e+00> : vector<50x128xf32>
    %2 = tpu.matmul %0, %1, %cst {dimension_numbers = #tpu.dot_dimension_numbers<[1], [0], [0], [1], [0, 0, 1, 1], [], []>} : vector<50x400xbf16>, vector<400x128xbf16>, vector<50x128xf32> -> vector<50x128xf32>
    %c0_3 = arith.constant 0 : index
    %c0_4 = arith.constant 0 : index
    %3 = vector.load %arg2[%c0_3, %c0_4] : memref<3x128xf32, #tpu.memory_space<vmem>>, vector<1x128xf32>
    %4 = vector.broadcast %3 : vector<1x128xf32> to vector<50x128xf32>
    %5 = arith.addf %2, %4 : vector<50x128xf32>
    %cst_5 = arith.constant dense<0.000000e+00> : vector<128xf32>
    %6 = vector.multi_reduction <add>, %5, %cst_5 [0] : vector<50x128xf32> to vector<128xf32>
    %7 = vector.shape_cast %6 : vector<128xf32> to vector<1x128xf32>
    %cst_6 = arith.constant 2.000000e-02 : f32
    %8 = vector.broadcast %cst_6 : f32 to vector<1x128xf32>
    %9 = arith.mulf %7, %8 : vector<1x128xf32>
    %10 = arith.mulf %5, %5 : vector<50x128xf32>
    %cst_7 = arith.constant dense<0.000000e+00> : vector<128xf32>
    %11 = vector.multi_reduction <add>, %10, %cst_7 [0] : vector<50x128xf32> to vector<128xf32>
    %12 = vector.shape_cast %11 : vector<128xf32> to vector<1x128xf32>
    %cst_8 = arith.constant 2.000000e-02 : f32
    %13 = vector.broadcast %cst_8 : f32 to vector<1x128xf32>
    %14 = arith.mulf %12, %13 : vector<1x128xf32>
    %15 = arith.mulf %9, %9 : vector<1x128xf32>
    %16 = arith.subf %14, %15 : vector<1x128xf32>
    %cst_9 = arith.constant 0.000000e+00 : f32
    %17 = vector.broadcast %cst_9 : f32 to vector<1x128xf32>
    %18 = arith.maximumf %16, %17 : vector<1x128xf32>
    %c1 = arith.constant 1 : index
    %c0_10 = arith.constant 0 : index
    %19 = vector.load %arg2[%c1, %c0_10] : memref<3x128xf32, #tpu.memory_space<vmem>>, vector<1x128xf32>
    %cst_11 = arith.constant 9.99999974E-6 : f32
    %20 = vector.broadcast %cst_11 : f32 to vector<1x128xf32>
    %21 = arith.addf %18, %20 : vector<1x128xf32>
    %22 = math.rsqrt %21 : vector<1x128xf32>
    %23 = arith.mulf %19, %22 : vector<1x128xf32>
    %c2 = arith.constant 2 : index
    %c0_12 = arith.constant 0 : index
    %24 = vector.load %arg2[%c2, %c0_12] : memref<3x128xf32, #tpu.memory_space<vmem>>, vector<1x128xf32>
    %25 = arith.mulf %9, %23 : vector<1x128xf32>
    %26 = arith.subf %24, %25 : vector<1x128xf32>
    %27 = vector.broadcast %23 : vector<1x128xf32> to vector<50x128xf32>
    %28 = arith.mulf %5, %27 : vector<50x128xf32>
    %29 = vector.broadcast %26 : vector<1x128xf32> to vector<50x128xf32>
    %30 = arith.addf %28, %29 : vector<50x128xf32>
    %cst_13 = arith.constant 0.000000e+00 : f32
    %31 = vector.broadcast %cst_13 : f32 to vector<50x128xf32>
    %32 = arith.cmpf ogt, %30, %31 : vector<50x128xf32>
    %cst_14 = arith.constant 2.000000e-01 : f32
    %33 = vector.broadcast %cst_14 : f32 to vector<50x128xf32>
    %34 = arith.mulf %33, %30 : vector<50x128xf32>
    %35 = arith.select %32, %30, %34 : vector<50x128xi1>, vector<50x128xf32>
    %c0_15 = arith.constant 0 : index
    %c0_16 = arith.constant 0 : index
    %36 = vector.load %arg3[%c0_15, %c0_16] : memref<50x128xf32, #tpu.memory_space<vmem>>, vector<50x128xf32>
    tpu.vector_store %arg3[%c0_15, %c0_16], %35 {strides = array<i32>} : memref<50x128xf32, #tpu.memory_space<vmem>>, vector<50x128xf32>,
    return
  }
}

module attributes {stable_mosaic.version = 11 : i64} {
  func.func @conv_bn_lrelu_linear_kernel(%arg0: memref<2x800xbf16, #tpu.memory_space<vmem>>, %arg1: memref<800x128xbf16, #tpu.memory_space<vmem>>, %arg2: memref<4x128xf32, #tpu.memory_space<vmem>>, %arg3: memref<128x128xbf16, #tpu.memory_space<vmem>>, %arg4: memref<2x128xf32, #tpu.memory_space<vmem>>) attributes {dimension_semantics = [], scalar_prefetch = 0 : i64, scratch_operands = 0 : i64, tpu.core_type = #tpu.core_type<tc>} {
    %c0 = arith.constant 0 : index
    %c0_0 = arith.constant 0 : index
    %0 = vector.load %arg0[%c0, %c0_0] : memref<2x800xbf16, #tpu.memory_space<vmem>>, vector<2x800xbf16>
    %c0_1 = arith.constant 0 : index
    %c0_2 = arith.constant 0 : index
    %1 = vector.load %arg1[%c0_1, %c0_2] : memref<800x128xbf16, #tpu.memory_space<vmem>>, vector<800x128xbf16>
    %cst = arith.constant dense<0.000000e+00> : vector<2x128xf32>
    %2 = tpu.matmul %0, %1, %cst {dimension_numbers = #tpu.dot_dimension_numbers<[1], [0], [0], [1], [0, 0, 1, 1], [], []>} : vector<2x800xbf16>, vector<800x128xbf16>, vector<2x128xf32> -> vector<2x128xf32>
    %c0_3 = arith.constant 0 : index
    %c0_4 = arith.constant 0 : index
    %3 = vector.load %arg2[%c0_3, %c0_4] : memref<4x128xf32, #tpu.memory_space<vmem>>, vector<1x128xf32>
    %4 = vector.broadcast %3 : vector<1x128xf32> to vector<2x128xf32>
    %5 = arith.addf %2, %4 : vector<2x128xf32>
    %cst_5 = arith.constant dense<0.000000e+00> : vector<128xf32>
    %6 = vector.multi_reduction <add>, %5, %cst_5 [0] : vector<2x128xf32> to vector<128xf32>
    %7 = vector.shape_cast %6 : vector<128xf32> to vector<1x128xf32>
    %cst_6 = arith.constant 5.000000e-01 : f32
    %8 = vector.broadcast %cst_6 : f32 to vector<1x128xf32>
    %9 = arith.mulf %7, %8 : vector<1x128xf32>
    %10 = arith.mulf %5, %5 : vector<2x128xf32>
    %cst_7 = arith.constant dense<0.000000e+00> : vector<128xf32>
    %11 = vector.multi_reduction <add>, %10, %cst_7 [0] : vector<2x128xf32> to vector<128xf32>
    %12 = vector.shape_cast %11 : vector<128xf32> to vector<1x128xf32>
    %cst_8 = arith.constant 5.000000e-01 : f32
    %13 = vector.broadcast %cst_8 : f32 to vector<1x128xf32>
    %14 = arith.mulf %12, %13 : vector<1x128xf32>
    %15 = arith.mulf %9, %9 : vector<1x128xf32>
    %16 = arith.subf %14, %15 : vector<1x128xf32>
    %cst_9 = arith.constant 0.000000e+00 : f32
    %17 = vector.broadcast %cst_9 : f32 to vector<1x128xf32>
    %18 = arith.maximumf %16, %17 : vector<1x128xf32>
    %c1 = arith.constant 1 : index
    %c0_10 = arith.constant 0 : index
    %19 = vector.load %arg2[%c1, %c0_10] : memref<4x128xf32, #tpu.memory_space<vmem>>, vector<1x128xf32>
    %cst_11 = arith.constant 9.99999974E-6 : f32
    %20 = vector.broadcast %cst_11 : f32 to vector<1x128xf32>
    %21 = arith.addf %18, %20 : vector<1x128xf32>
    %22 = math.rsqrt %21 : vector<1x128xf32>
    %23 = arith.mulf %19, %22 : vector<1x128xf32>
    %c2 = arith.constant 2 : index
    %c0_12 = arith.constant 0 : index
    %24 = vector.load %arg2[%c2, %c0_12] : memref<4x128xf32, #tpu.memory_space<vmem>>, vector<1x128xf32>
    %25 = arith.mulf %9, %23 : vector<1x128xf32>
    %26 = arith.subf %24, %25 : vector<1x128xf32>
    %27 = vector.broadcast %23 : vector<1x128xf32> to vector<2x128xf32>
    %28 = arith.mulf %5, %27 : vector<2x128xf32>
    %29 = vector.broadcast %26 : vector<1x128xf32> to vector<2x128xf32>
    %30 = arith.addf %28, %29 : vector<2x128xf32>
    %cst_13 = arith.constant 0.000000e+00 : f32
    %31 = vector.broadcast %cst_13 : f32 to vector<2x128xf32>
    %32 = arith.cmpf ogt, %30, %31 : vector<2x128xf32>
    %cst_14 = arith.constant 2.000000e-01 : f32
    %33 = vector.broadcast %cst_14 : f32 to vector<2x128xf32>
    %34 = arith.mulf %33, %30 : vector<2x128xf32>
    %35 = arith.select %32, %30, %34 : vector<2x128xi1>, vector<2x128xf32>
    %36 = arith.truncf %35 : vector<2x128xf32> to vector<2x128xbf16>
    %c0_15 = arith.constant 0 : index
    %c0_16 = arith.constant 0 : index
    %37 = vector.load %arg3[%c0_15, %c0_16] : memref<128x128xbf16, #tpu.memory_space<vmem>>, vector<128x128xbf16>
    %cst_17 = arith.constant dense<0.000000e+00> : vector<2x128xf32>
    %38 = tpu.matmul %36, %37, %cst_17 {dimension_numbers = #tpu.dot_dimension_numbers<[1], [0], [0], [1], [0, 0, 1, 1], [], []>} : vector<2x128xbf16>, vector<128x128xbf16>, vector<2x128xf32> -> vector<2x128xf32>
    %c3 = arith.constant 3 : index
    %c0_18 = arith.constant 0 : index
    %39 = vector.load %arg2[%c3, %c0_18] : memref<4x128xf32, #tpu.memory_space<vmem>>, vector<1x128xf32>
    %40 = vector.broadcast %39 : vector<1x128xf32> to vector<2x128xf32>
    %41 = arith.addf %38, %40 : vector<2x128xf32>
    %c0_19 = arith.constant 0 : index
    %c0_20 = arith.constant 0 : index
    %42 = vector.load %arg4[%c0_19, %c0_20] : memref<2x128xf32, #tpu.memory_space<vmem>>, vector<2x128xf32>
    tpu.vector_store %arg4[%c0_19, %c0_20], %41 {strides = array<i32>} : memref<2x128xf32, #tpu.memory_space<vmem>>, vector<2x128xf32>,
    return
  }
}

</mosaic_0001>

<llo_original>
// kernel: discriminator_forward.3
$region0: #{discriminator_forward.3}
  #allocation0 [shape = 'u32[]', space=smem, size = 0x4, offset = 0x4, fixed_abs, tag = 'smem constant byte address 0x4 - core index']
  #allocation1 [shape = 'u32[144,128]{1,0:T(1,128)}', space=vmem, size = 0x12000, scoped, tag = 'internal scratch']
  %s0 = inlined_call_operand.vmem [shape: bf16[338,9], index: 0, kind: input, shape index: {}]
  %s1 = inlined_call_operand.vmem [shape: bf16[9,128], index: 1, kind: input, shape index: {}]
  %s2 = inlined_call_operand.vmem [shape: f32[3,128], index: 2, kind: input, shape index: {}]
  %s3 = inlined_call_operand.vmem [shape: f32[338,128], index: 3, kind: output, shape index: {}]
  %s4 = sld [smem:[#allocation0]]
  $region22: #{discriminator_forward.3} parent=0
    _
  %s6 = ssub.s32 1, %s4
  %s7 = scalar_select 0, %s6, %s4
  // Predicated region
  $region2: #{discriminator_forward.3} parent=0 // pred_check
    _
  $region3: #{discriminator_forward.3} parent=0 // pred_check_branch
    %9 = sbr.rel (0) target = $region5
  $region4: #{discriminator_forward.3} parent=0 // pred_region
    _
  $region5: #{discriminator_forward.3} parent=0 // pred_fallthru
    _
  // Predicated region
  $region6: #{discriminator_forward.3} parent=0 // pred_check
    _
  $region7: #{discriminator_forward.3} parent=0 // pred_check_branch
    %11 = sbr.rel (0) target = $region9
  $region8: #{discriminator_forward.3} parent=0 // pred_region
    _
  $region9: #{discriminator_forward.3} parent=0 // pred_fallthru
    _
  // Predicated region
  $region10: #{discriminator_forward.3} parent=0 // pred_check
    _
  $region11: #{discriminator_forward.3} parent=0 // pred_check_branch
    %13 = sbr.rel (0) target = $region13
  $region12: #{discriminator_forward.3} parent=0 // pred_region
    _
  $region13: #{discriminator_forward.3} parent=0 // pred_fallthru
    _
  %v15 = vld [vmem:[%s0] sm:$0xf]
  %v16 = vld [vmem:[%s0 + $0x4] sm:$0xf]
  %v17 = vld [vmem:[%s0 + $0x8] sm:$0xf]
  %v18 = vld [vmem:[%s0 + $0xc] sm:$0xf]
  %v19 = vld [vmem:[%s0 + $0x10] sm:$0xf]
  %v20 = vld [vmem:[%s0 + $0x14] sm:$0xf]
  %v21 = vld [vmem:[%s0 + $0x18] sm:$0xf]
  %v22 = vld [vmem:[%s0 + $0x1c] sm:$0xf]
  %v23 = vld [vmem:[%s0 + $0x20] sm:$0xf]
  %v24 = vld [vmem:[%s0 + $0x24] sm:$0xf]
  %v25 = vld [vmem:[%s0 + $0x28] sm:$0xf]
  %v26 = vld [vmem:[%s0 + $0x2c] sm:$0xf]
  %v27 = vld [vmem:[%s0 + $0x30] sm:$0xf]
  %v28 = vld [vmem:[%s0 + $0x34] sm:$0xf]
  %v29 = vld [vmem:[%s0 + $0x38] sm:$0xf]
  %v30 = vld [vmem:[%s0 + $0x3c] sm:$0xf]
  %v31 = vld [vmem:[%s0 + $0x40] sm:$0xf]
  %v32 = vld [vmem:[%s0 + $0x44] sm:$0xf]
  %v33 = vld [vmem:[%s0 + $0x48] sm:$0xf]
  %v34 = vld [vmem:[%s0 + $0x4c] sm:$0xf]
  %v35 = vld [vmem:[%s0 + $0x50] sm:$0xf]
  %v36 = vld [vmem:[%s0 + $0x54] sm:$0xf]
  %v37 = vld [vmem:[%s0 + $0x58] sm:$0xf]
  %v38 = vld [vmem:[%s0 + $0x5c] sm:$0xf]
  %v39 = vld [vmem:[%s0 + $0x60] sm:$0xf]
  %v40 = vld [vmem:[%s0 + $0x64] sm:$0xf]
  %v41 = vld [vmem:[%s0 + $0x68] sm:$0xf]
  %v42 = vld [vmem:[%s0 + $0x6c] sm:$0xf]
  %v43 = vld [vmem:[%s0 + $0x70] sm:$0xf]
  %v44 = vld [vmem:[%s0 + $0x74] sm:$0xf]
  %v45 = vld [vmem:[%s0 + $0x78] sm:$0xf]
  %v46 = vld [vmem:[%s0 + $0x7c] sm:$0xf]
  %v47 = vld [vmem:[%s0 + $0x80] sm:$0xf]
  %v48 = vld [vmem:[%s0 + $0x84] sm:$0xf]
  %v49 = vld [vmem:[%s0 + $0x88] sm:$0xf]
  %v50 = vld [vmem:[%s0 + $0x8c] sm:$0xf]
  %v51 = vld [vmem:[%s0 + $0x90] sm:$0xf]
  %v52 = vld [vmem:[%s0 + $0x94] sm:$0xf]
  %v53 = vld [vmem:[%s0 + $0x98] sm:$0xf]
  %v54 = vld [vmem:[%s0 + $0x9c] sm:$0xf]
  %v55 = vld [vmem:[%s0 + $0xa0] sm:$0xf]
  %v56 = vld [vmem:[%s0 + $0xa4] sm:$0xf]
  %v57 = vld [vmem:[%s0 + $0xa8] sm:$0x1]
  %v58 = vld [vmem:[%s1] sm:$0xf]
  %v59 = vld [vmem:[%s1 + $0x4] sm:$0x1]
  %v60 = vld [vmem:[%s2] sm:$0x1]
  %v61 = vlaneseq
  %v62 = vshrl.u32 %v61, 7
  %v63 = vsub.s32 0, %v62
  %v64 = vrot.slane %v60, %v63
  %v108 = vunpack.c.l.b16 %v15
  %v109 = vunpack.c.l.b16 %v16
  %v110 = vunpack.c.l.b16 %v17
  %v111 = vunpack.c.l.b16 %v18
  %v112 = vunpack.c.l.b16 %v19
  %v113 = vunpack.c.l.b16 %v20
  %v114 = vunpack.c.l.b16 %v21
  %v115 = vunpack.c.l.b16 %v22
  %v116 = vunpack.c.l.b16 %v23
  %v117 = vunpack.c.l.b16 %v24
  %v118 = vunpack.c.l.b16 %v25
  %v119 = vunpack.c.l.b16 %v26
  %v120 = vunpack.c.l.b16 %v27
  %v121 = vunpack.c.l.b16 %v28
  %v122 = vunpack.c.l.b16 %v29
  %v123 = vunpack.c.l.b16 %v30
  %v124 = vunpack.c.l.b16 %v31
  %v125 = vunpack.c.l.b16 %v32
  %v126 = vunpack.c.l.b16 %v33
  %v127 = vunpack.c.l.b16 %v34
  %v128 = vunpack.c.l.b16 %v35
  %v129 = vunpack.c.l.b16 %v36
  %v130 = vunpack.c.l.b16 %v37
  %v131 = vunpack.c.l.b16 %v38
  %v132 = vunpack.c.l.b16 %v39
  %v133 = vunpack.c.l.b16 %v40
  %v134 = vunpack.c.l.b16 %v41
  %v135 = vunpack.c.l.b16 %v42
  %v136 = vunpack.c.l.b16 %v43
  %v137 = vunpack.c.l.b16 %v44
  %v138 = vunpack.c.l.b16 %v45
  %v139 = vunpack.c.l.b16 %v46
  %v140 = vunpack.c.l.b16 %v47
  %v141 = vunpack.c.l.b16 %v48
  %v142 = vunpack.c.l.b16 %v49
  %v143 = vunpack.c.l.b16 %v50
  %v144 = vunpack.c.l.b16 %v51
  %v145 = vunpack.c.l.b16 %v52
  %v146 = vunpack.c.l.b16 %v53
  %v147 = vunpack.c.l.b16 %v54
  %v148 = vunpack.c.l.b16 %v55
  %v149 = vunpack.c.l.b16 %v56
  %v150 = vunpack.c.l.b16 %v57
  %v151 = vpack.c.b16 %v109, %v108
  %v152 = vpack.c.b16 %v111, %v110
  %v153 = vpack.c.b16 %v113, %v112
  %v154 = vpack.c.b16 %v115, %v114
  %v155 = vpack.c.b16 %v117, %v116
  %v156 = vpack.c.b16 %v119, %v118
  %v157 = vpack.c.b16 %v121, %v120
  %v158 = vpack.c.b16 %v123, %v122
  %v159 = vpack.c.b16 %v125, %v124
  %v160 = vpack.c.b16 %v127, %v126
  %v161 = vpack.c.b16 %v129, %v128
  %v162 = vpack.c.b16 %v131, %v130
  %v163 = vpack.c.b16 %v133, %v132
  %v164 = vpack.c.b16 %v135, %v134
  %v165 = vpack.c.b16 %v137, %v136
  %v166 = vpack.c.b16 %v139, %v138
  %v167 = vpack.c.b16 %v141, %v140
  %v168 = vpack.c.b16 %v143, %v142
  %v169 = vpack.c.b16 %v145, %v144
  %v170 = vpack.c.b16 %v147, %v146
  %v171 = vpack.c.b16 %v149, %v148
  %v172 = vpack.c.b16 %v150, %v150
  %v175 = vunpack.c.l.b16 %v58
  %v176 = vunpack.c.l.b16 %v59
  %v177 = vpack.c.b16 %v176, %v175
  %vm178 = vcmask 72704
  %v180 = vsel %vm178, %v151, 0
  %v183 = vsel %vm178, %v152, 0
  %v186 = vsel %vm178, %v153, 0
  %v189 = vsel %vm178, %v154, 0
  %v192 = vsel %vm178, %v155, 0
  %v195 = vsel %vm178, %v156, 0
  %v198 = vsel %vm178, %v157, 0
  %v201 = vsel %vm178, %v158, 0
  %v204 = vsel %vm178, %v159, 0
  %v207 = vsel %vm178, %v160, 0
  %v210 = vsel %vm178, %v161, 0
  %v213 = vsel %vm178, %v162, 0
  %v216 = vsel %vm178, %v163, 0
  %v219 = vsel %vm178, %v164, 0
  %v222 = vsel %vm178, %v165, 0
  %v225 = vsel %vm178, %v166, 0
  %v228 = vsel %vm178, %v167, 0
  %v231 = vsel %vm178, %v168, 0
  %v234 = vsel %vm178, %v169, 0
  %v237 = vsel %vm178, %v170, 0
  %v240 = vsel %vm178, %v171, 0
  %v243 = vsel %vm178, %v172, 0
  %vm245 = vcmask 1043456
  %vm246 = vcmask 1044480
  %v247 = vsel %vm245, 4294967295, 65535
  %v248 = vsel %vm246, %v247, 0
  %v250 = vand.u32 %v177, %v248
  %252 = vmatprep.subr.bf16.mxu0 0
  %253 = vmatpush1.bf16.msra.mxu0 %v250
  %254 = vmatprep.subr.bf16.mxu0 0
  %255 = vmatpush1.bf16.msra.mxu0 0
  %256 = vmatprep.subr.bf16.mxu0 0
  %257 = vmatpush1.bf16.msra.mxu0 0
  %258 = vmatprep.subr.bf16.mxu0 0
  %259 = vmatpush1.bf16.msra.mxu0 0
  %260 = vmatprep.subr.bf16.mxu0 0
  %261 = vmatpush1.bf16.msra.mxu0 0
  %262 = vmatprep.subr.bf16.mxu0 0
  %263 = vmatpush1.bf16.msra.mxu0 0
  %264 = vmatprep.subr.bf16.mxu0 0
  %265 = vmatpush1.bf16.msra.mxu0 0
  %266 = vmatprep.subr.bf16.mxu0 0
  %267 = vmatpush1.bf16.msra.mxu0 0
  %268 = vmatprep.subr.bf16.mxu0 0
  %269 = vmatpush1.bf16.msra.mxu0 0
  %270 = vmatprep.subr.bf16.mxu0 0
  %271 = vmatpush1.bf16.msra.mxu0 0
  %272 = vmatprep.subr.bf16.mxu0 0
  %273 = vmatpush1.bf16.msra.mxu0 0
  %274 = vmatprep.subr.bf16.mxu0 0
  %275 = vmatpush1.bf16.msra.mxu0 0
  %276 = vmatprep.subr.bf16.mxu0 0
  %277 = vmatpush1.bf16.msra.mxu0 0
  %278 = vmatprep.subr.bf16.mxu0 0
  %279 = vmatpush1.bf16.msra.mxu0 0
  %280 = vmatprep.subr.bf16.mxu0 0
  %281 = vmatpush1.bf16.msra.mxu0 0
  %282 = vmatprep.subr.bf16.mxu0 0
  %283 = vmatpush1.bf16.msra.mxu0 0
  %284 = vmatprep.mubr.bf16.mxu0 0
  %285 = vmatmul.mubr.bf16.gmra.mrb[0].mxu0 %v180
  %v286 = vpop.f32.mrb[0].mxu0
  %v287 = vadd.f32 %v64, %v286
  %v288 = vpop.f32.mrb[0].mxu0
  %v289 = vpop.f32.mrb[0].mxu0
  %v290 = vadd.f32 %v64, %v289
  %v291 = vpop.f32.mrb[0].mxu0
  %292 = vmatprep.mubr.bf16.mxu0 0
  %293 = vmatmul.mubr.bf16.gmra.mrb[0].mxu0 %v183
  %v294 = vpop.f32.mrb[0].mxu0
  %v295 = vadd.f32 %v64, %v294
  %v296 = vpop.f32.mrb[0].mxu0
  %v297 = vpop.f32.mrb[0].mxu0
  %v298 = vadd.f32 %v64, %v297
  %v299 = vpop.f32.mrb[0].mxu0
  %300 = vmatprep.mubr.bf16.mxu0 0
  %301 = vmatmul.mubr.bf16.gmra.mrb[0].mxu0 %v186
  %v302 = vpop.f32.mrb[0].mxu0
  %v303 = vadd.f32 %v64, %v302
  %v304 = vpop.f32.mrb[0].mxu0
  %v305 = vpop.f32.mrb[0].mxu0
  %v306 = vadd.f32 %v64, %v305
  %v307 = vpop.f32.mrb[0].mxu0
  %308 = vmatprep.mubr.bf16.mxu0 0
  %309 = vmatmul.mubr.bf16.gmra.mrb[0].mxu0 %v189
  %v310 = vpop.f32.mrb[0].mxu0
  %v311 = vadd.f32 %v64, %v310
  %v312 = vpop.f32.mrb[0].mxu0
  %v313 = vpop.f32.mrb[0].mxu0
  %v314 = vadd.f32 %v64, %v313
  %v315 = vpop.f32.mrb[0].mxu0
  %316 = vmatprep.mubr.bf16.mxu0 0
  %317 = vmatmul.mubr.bf16.gmra.mrb[0].mxu0 %v192
  %v318 = vpop.f32.mrb[0].mxu0
  %v319 = vadd.f32 %v64, %v318
  %v320 = vpop.f32.mrb[0].mxu0
  %v321 = vpop.f32.mrb[0].mxu0
  %v322 = vadd.f32 %v64, %v321
  %v323 = vpop.f32.mrb[0].mxu0
  %324 = vmatprep.mubr.bf16.mxu0 0
  %325 = vmatmul.mubr.bf16.gmra.mrb[0].mxu0 %v195
  %v326 = vpop.f32.mrb[0].mxu0
  %v327 = vadd.f32 %v64, %v326
  %v328 = vpop.f32.mrb[0].mxu0
  %v329 = vpop.f32.mrb[0].mxu0
  %v330 = vadd.f32 %v64, %v329
  %v331 = vpop.f32.mrb[0].mxu0
  %332 = vmatprep.mubr.bf16.mxu0 0
  %333 = vmatmul.mubr.bf16.gmra.mrb[0].mxu0 %v198
  %v334 = vpop.f32.mrb[0].mxu0
  %v335 = vadd.f32 %v64, %v334
  %v336 = vpop.f32.mrb[0].mxu0
  %v337 = vpop.f32.mrb[0].mxu0
  %v338 = vadd.f32 %v64, %v337
  %v339 = vpop.f32.mrb[0].mxu0
  %340 = vmatprep.mubr.bf16.mxu0 0
  %341 = vmatmul.mubr.bf16.gmra.mrb[0].mxu0 %v201
  %v342 = vpop.f32.mrb[0].mxu0
  %v343 = vadd.f32 %v64, %v342
  %v344 = vpop.f32.mrb[0].mxu0
  %v345 = vpop.f32.mrb[0].mxu0
  %v346 = vadd.f32 %v64, %v345
  %v347 = vpop.f32.mrb[0].mxu0
  %348 = vmatprep.mubr.bf16.mxu0 0
  %349 = vmatmul.mubr.bf16.gmra.mrb[0].mxu0 %v204
  %v350 = vpop.f32.mrb[0].mxu0
  %v351 = vadd.f32 %v64, %v350
  %v352 = vpop.f32.mrb[0].mxu0
  %v353 = vpop.f32.mrb[0].mxu0
  %v354 = vadd.f32 %v64, %v353
  %v355 = vpop.f32.mrb[0].mxu0
  %356 = vmatprep.mubr.bf16.mxu0 0
  %357 = vmatmul.mubr.bf16.gmra.mrb[0].mxu0 %v207
  %v358 = vpop.f32.mrb[0].mxu0
  %v359 = vadd.f32 %v64, %v358
  %v360 = vpop.f32.mrb[0].mxu0
  %v361 = vpop.f32.mrb[0].mxu0
  %v362 = vadd.f32 %v64, %v361
  %v363 = vpop.f32.mrb[0].mxu0
  %364 = vmatprep.mubr.bf16.mxu0 0
  %365 = vmatmul.mubr.bf16.gmra.mrb[0].mxu0 %v210
  %v366 = vpop.f32.mrb[0].mxu0
  %v367 = vadd.f32 %v64, %v366
  %v368 = vpop.f32.mrb[0].mxu0
  %v369 = vpop.f32.mrb[0].mxu0
  %v370 = vadd.f32 %v64, %v369
  %v371 = vpop.f32.mrb[0].mxu0
  %372 = vmatprep.mubr.bf16.mxu0 0
  %373 = vmatmul.mubr.bf16.gmra.mrb[0].mxu0 %v213
  %v374 = vpop.f32.mrb[0].mxu0
  %v375 = vadd.f32 %v64, %v374
  %v376 = vpop.f32.mrb[0].mxu0
  %v377 = vpop.f32.mrb[0].mxu0
  %v378 = vadd.f32 %v64, %v377
  %v379 = vpop.f32.mrb[0].mxu0
  %380 = vmatprep.mubr.bf16.mxu0 0
  %381 = vmatmul.mubr.bf16.gmra.mrb[0].mxu0 %v216
  %v382 = vpop.f32.mrb[0].mxu0
  %v383 = vadd.f32 %v64, %v382
  %v384 = vpop.f32.mrb[0].mxu0
  %v385 = vpop.f32.mrb[0].mxu0
  %v386 = vadd.f32 %v64, %v385
  %v387 = vpop.f32.mrb[0].mxu0
  %388 = vmatprep.mubr.bf16.mxu0 0
  %389 = vmatmul.mubr.bf16.gmra.mrb[0].mxu0 %v219
  %v390 = vpop.f32.mrb[0].mxu0
  %v391 = vadd.f32 %v64, %v390
  %v392 = vpop.f32.mrb[0].mxu0
  %v393 = vpop.f32.mrb[0].mxu0
  %v394 = vadd.f32 %v64, %v393
  %v395 = vpop.f32.mrb[0].mxu0
  %396 = vmatprep.mubr.bf16.mxu0 0
  %397 = vmatmul.mubr.bf16.gmra.mrb[0].mxu0 %v222
  %v398 = vpop.f32.mrb[0].mxu0
  %v399 = vadd.f32 %v64, %v398
  %v400 = vpop.f32.mrb[0].mxu0
  %v401 = vpop.f32.mrb[0].mxu0
  %v402 = vadd.f32 %v64, %v401
  %v403 = vpop.f32.mrb[0].mxu0
  %404 = vmatprep.mubr.bf16.mxu0 0
  %405 = vmatmul.mubr.bf16.gmra.mrb[0].mxu0 %v225
  %v406 = vpop.f32.mrb[0].mxu0
  %v407 = vadd.f32 %v64, %v406
  %v408 = vpop.f32.mrb[0].mxu0
  %v409 = vpop.f32.mrb[0].mxu0
  %v410 = vadd.f32 %v64, %v409
  %v411 = vpop.f32.mrb[0].mxu0
  %412 = vmatprep.mubr.bf16.mxu0 0
  %413 = vmatmul.mubr.bf16.gmra.mrb[0].mxu0 %v228
  %v414 = vpop.f32.mrb[0].mxu0
  %v415 = vadd.f32 %v64, %v414
  %v416 = vpop.f32.mrb[0].mxu0
  %v417 = vpop.f32.mrb[0].mxu0
  %v418 = vadd.f32 %v64, %v417
  %v419 = vpop.f32.mrb[0].mxu0
  %420 = vmatprep.mubr.bf16.mxu0 0
  %421 = vmatmul.mubr.bf16.gmra.mrb[0].mxu0 %v231
  %v422 = vpop.f32.mrb[0].mxu0
  %v423 = vadd.f32 %v64, %v422
  %v424 = vpop.f32.mrb[0].mxu0
  %v425 = vpop.f32.mrb[0].mxu0
  %v426 = vadd.f32 %v64, %v425
  %v427 = vpop.f32.mrb[0].mxu0
  %428 = vmatprep.mubr.bf16.mxu0 0
  %429 = vmatmul.mubr.bf16.gmra.mrb[0].mxu0 %v234
  %v430 = vpop.f32.mrb[0].mxu0
  %v431 = vadd.f32 %v64, %v430
  %v432 = vpop.f32.mrb[0].mxu0
  %v433 = vpop.f32.mrb[0].mxu0
  %v434 = vadd.f32 %v64, %v433
  %v435 = vpop.f32.mrb[0].mxu0
  %436 = vmatprep.mubr.bf16.mxu0 0
  %437 = vmatmul.mubr.bf16.gmra.mrb[0].mxu0 %v237
  %v438 = vpop.f32.mrb[0].mxu0
  %v439 = vadd.f32 %v64, %v438
  %v440 = vpop.f32.mrb[0].mxu0
  %v441 = vpop.f32.mrb[0].mxu0
  %v442 = vadd.f32 %v64, %v441
  %v443 = vpop.f32.mrb[0].mxu0
  %444 = vmatprep.mubr.bf16.mxu0 0
  %445 = vmatmul.mubr.bf16.gmra.mrb[0].mxu0 %v240
  %v446 = vpop.f32.mrb[0].mxu0
  %v447 = vadd.f32 %v64, %v446
  %v448 = vpop.f32.mrb[0].mxu0
  %v449 = vpop.f32.mrb[0].mxu0
  %v450 = vadd.f32 %v64, %v449
  %v451 = vpop.f32.mrb[0].mxu0
  %452 = vmatprep.mubr.bf16.mxu0 0
  %453 = vmatmul.mubr.bf16.gmra.mrb[0].mxu0 %v243
  %v454 = vpop.f32.mrb[0].mxu0
  %v455 = vadd.f32 %v64, %v454
  %v456 = vpop.f32.mrb[0].mxu0
  %v457 = vpop.f32.mrb[0].mxu0
  %v458 = vpop.f32.mrb[0].mxu0
  %459 = vdwg.mxu0
  %v460 = vadd.f32 %v287, %v290
  %v461 = vadd.f32 %v460, %v295
  %v462 = vadd.f32 %v461, %v298
  %v463 = vadd.f32 %v462, %v303
  %v464 = vadd.f32 %v463, %v306
  %v465 = vadd.f32 %v464, %v311
  %v466 = vadd.f32 %v465, %v314
  %v467 = vadd.f32 %v466, %v319
  %v468 = vadd.f32 %v467, %v322
  %v469 = vadd.f32 %v468, %v327
  %v470 = vadd.f32 %v469, %v330
  %v471 = vadd.f32 %v470, %v335
  %v472 = vadd.f32 %v471, %v338
  %v473 = vadd.f32 %v472, %v343
  %v474 = vadd.f32 %v473, %v346
  %v475 = vadd.f32 %v474, %v351
  %v476 = vadd.f32 %v475, %v354
  %v477 = vadd.f32 %v476, %v359
  %v478 = vadd.f32 %v477, %v362
  %v479 = vadd.f32 %v478, %v367
  %v480 = vadd.f32 %v479, %v370
  %v481 = vadd.f32 %v480, %v375
  %v482 = vadd.f32 %v481, %v378
  %v483 = vadd.f32 %v482, %v383
  %v484 = vadd.f32 %v483, %v386
  %v485 = vadd.f32 %v484, %v391
  %v486 = vadd.f32 %v485, %v394
  %v487 = vadd.f32 %v486, %v399
  %v488 = vadd.f32 %v487, %v402
  %v489 = vadd.f32 %v488, %v407
  %v490 = vadd.f32 %v489, %v410
  %v491 = vadd.f32 %v490, %v415
  %v492 = vadd.f32 %v491, %v418
  %v493 = vadd.f32 %v492, %v423
  %v494 = vadd.f32 %v493, %v426
  %v495 = vadd.f32 %v494, %v431
  %v496 = vadd.f32 %v495, %v434
  %v497 = vadd.f32 %v496, %v439
  %v498 = vadd.f32 %v497, %v442
  %v499 = vadd.f32 %v498, %v447
  %v500 = vadd.f32 %v499, %v450
  %vm501 = vcmask 1041408
  %v502 = vsel %vm501, %v455, 0.0
  %v503 = vadd.f32 %v500, %v502
  %v504 = vrot.slane %v503, 4
  %v505 = vadd.f32 %v503, %v504
  %v506 = vrot.slane %v505, 2
  %v507 = vadd.f32 %v505, %v506
  %v508 = vrot.slane %v507, 1
  %v509 = vadd.f32 %v507, %v508
  %v510 = vmul.f32 %v509, 0.00295858
  %v511 = vmul.f32 %v287, %v287
  %v512 = vmul.f32 %v290, %v290
  %v513 = vmul.f32 %v295, %v295
  %v514 = vmul.f32 %v298, %v298
  %v515 = vmul.f32 %v303, %v303
  %v516 = vmul.f32 %v306, %v306
  %v517 = vmul.f32 %v311, %v311
  %v518 = vmul.f32 %v314, %v314
  %v519 = vmul.f32 %v319, %v319
  %v520 = vmul.f32 %v322, %v322
  %v521 = vmul.f32 %v327, %v327
  %v522 = vmul.f32 %v330, %v330
  %v523 = vmul.f32 %v335, %v335
  %v524 = vmul.f32 %v338, %v338
  %v525 = vmul.f32 %v343, %v343
  %v526 = vmul.f32 %v346, %v346
  %v527 = vmul.f32 %v351, %v351
  %v528 = vmul.f32 %v354, %v354
  %v529 = vmul.f32 %v359, %v359
  %v530 = vmul.f32 %v362, %v362
  %v531 = vmul.f32 %v367, %v367
  %v532 = vmul.f32 %v370, %v370
  %v533 = vmul.f32 %v375, %v375
  %v534 = vmul.f32 %v378, %v378
  %v535 = vmul.f32 %v383, %v383
  %v536 = vmul.f32 %v386, %v386
  %v537 = vmul.f32 %v391, %v391
  %v538 = vmul.f32 %v394, %v394
  %v539 = vmul.f32 %v399, %v399
  %v540 = vmul.f32 %v402, %v402
  %v541 = vmul.f32 %v407, %v407
  %v542 = vmul.f32 %v410, %v410
  %v543 = vmul.f32 %v415, %v415
  %v544 = vmul.f32 %v418, %v418
  %v545 = vmul.f32 %v423, %v423
  %v546 = vmul.f32 %v426, %v426
  %v547 = vmul.f32 %v431, %v431
  %v548 = vmul.f32 %v434, %v434
  %v549 = vmul.f32 %v439, %v439
  %v550 = vmul.f32 %v442, %v442
  %v551 = vmul.f32 %v447, %v447
  %v552 = vmul.f32 %v450, %v450
  %v553 = vmul.f32 %v455, %v455
  %v554 = vadd.f32 %v511, %v512
  %v555 = vadd.f32 %v554, %v513
  %v556 = vadd.f32 %v555, %v514
  %v557 = vadd.f32 %v556, %v515
  %v558 = vadd.f32 %v557, %v516
  %v559 = vadd.f32 %v558, %v517
  %v560 = vadd.f32 %v559, %v518
  %v561 = vadd.f32 %v560, %v519
  %v562 = vadd.f32 %v561, %v520
  %v563 = vadd.f32 %v562, %v521
  %v564 = vadd.f32 %v563, %v522
  %v565 = vadd.f32 %v564, %v523
  %v566 = vadd.f32 %v565, %v524
  %v567 = vadd.f32 %v566, %v525
  %v568 = vadd.f32 %v567, %v526
  %v569 = vadd.f32 %v568, %v527
  %v570 = vadd.f32 %v569, %v528
  %v571 = vadd.f32 %v570, %v529
  %v572 = vadd.f32 %v571, %v530
  %v573 = vadd.f32 %v572, %v531
  %v574 = vadd.f32 %v573, %v532
  %v575 = vadd.f32 %v574, %v533
  %v576 = vadd.f32 %v575, %v534
  %v577 = vadd.f32 %v576, %v535
  %v578 = vadd.f32 %v577, %v536
  %v579 = vadd.f32 %v578, %v537
  %v580 = vadd.f32 %v579, %v538
  %v581 = vadd.f32 %v580, %v539
  %v582 = vadd.f32 %v581, %v540
  %v583 = vadd.f32 %v582, %v541
  %v584 = vadd.f32 %v583, %v542
  %v585 = vadd.f32 %v584, %v543
  %v586 = vadd.f32 %v585, %v544
  %v587 = vadd.f32 %v586, %v545
  %v588 = vadd.f32 %v587, %v546
  %v589 = vadd.f32 %v588, %v547
  %v590 = vadd.f32 %v589, %v548
  %v591 = vadd.f32 %v590, %v549
  %v592 = vadd.f32 %v591, %v550
  %v593 = vadd.f32 %v592, %v551
  %v594 = vadd.f32 %v593, %v552
  %v595 = vsel %vm501, %v553, 0.0
  %v596 = vadd.f32 %v594, %v595
  %v597 = vrot.slane %v596, 4
  %v598 = vadd.f32 %v596, %v597
  %v599 = vrot.slane %v598, 2
  %v600 = vadd.f32 %v598, %v599
  %v601 = vrot.slane %v600, 1
  %v602 = vadd.f32 %v600, %v601
  %v603 = vmul.f32 %v602, 0.00295858
  %v604 = vmul.f32 %v510, %v510
  %v605 = vsub.f32 %v603, %v604
  %v606 = vmax.f32 %v605, 0.0
  %v607 = vld [vmem:[%s2 + $0x1] sm:$0x1]
  %v608 = vadd.f32 %v606, 1e-05
  %v609 = vrsqrt.pop %v608
  %v610 = vmul.f32 %v607, %v609
  %v611 = vld [vmem:[%s2 + $0x2] sm:$0x1]
  %v612 = vmul.f32 %v510, %v610
  %v613 = vsub.f32 %v611, %v612
  %v614 = vlaneseq
  %v615 = vshrl.u32 %v614, 7
  %v616 = vsub.s32 0, %v615
  %v617 = vrot.slane %v610, %v616
  %v618 = vmul.f32 %v287, %v617
  %v619 = vmul.f32 %v290, %v617
  %v620 = vmul.f32 %v295, %v617
  %v621 = vmul.f32 %v298, %v617
  %v622 = vmul.f32 %v303, %v617
  %v623 = vmul.f32 %v306, %v617
  %v624 = vmul.f32 %v311, %v617
  %v625 = vmul.f32 %v314, %v617
  %v626 = vmul.f32 %v319, %v617
  %v627 = vmul.f32 %v322, %v617
  %v628 = vmul.f32 %v327, %v617
  %v629 = vmul.f32 %v330, %v617
  %v630 = vmul.f32 %v335, %v617
  %v631 = vmul.f32 %v338, %v617
  %v632 = vmul.f32 %v343, %v617
  %v633 = vmul.f32 %v346, %v617
  %v634 = vmul.f32 %v351, %v617
  %v635 = vmul.f32 %v354, %v617
  %v636 = vmul.f32 %v359, %v617
  %v637 = vmul.f32 %v362, %v617
  %v638 = vmul.f32 %v367, %v617
  %v639 = vmul.f32 %v370, %v617
  %v640 = vmul.f32 %v375, %v617
  %v641 = vmul.f32 %v378, %v617
  %v642 = vmul.f32 %v383, %v617
  %v643 = vmul.f32 %v386, %v617
  %v644 = vmul.f32 %v391, %v617
  %v645 = vmul.f32 %v394, %v617
  %v646 = vmul.f32 %v399, %v617
  %v647 = vmul.f32 %v402, %v617
  %v648 = vmul.f32 %v407, %v617
  %v649 = vmul.f32 %v410, %v617
  %v650 = vmul.f32 %v415, %v617
  %v651 = vmul.f32 %v418, %v617
  %v652 = vmul.f32 %v423, %v617
  %v653 = vmul.f32 %v426, %v617
  %v654 = vmul.f32 %v431, %v617
  %v655 = vmul.f32 %v434, %v617
  %v656 = vmul.f32 %v439, %v617
  %v657 = vmul.f32 %v442, %v617
  %v658 = vmul.f32 %v447, %v617
  %v659 = vmul.f32 %v450, %v617
  %v660 = vmul.f32 %v455, %v617
  %v661 = vlaneseq
  %v662 = vshrl.u32 %v661, 7
  %v663 = vsub.s32 0, %v662
  %v664 = vrot.slane %v613, %v663
  %v665 = vadd.f32 %v618, %v664
  %v666 = vadd.f32 %v619, %v664
  %v667 = vadd.f32 %v620, %v664
  %v668 = vadd.f32 %v621, %v664
  %v669 = vadd.f32 %v622, %v664
  %v670 = vadd.f32 %v623, %v664
  %v671 = vadd.f32 %v624, %v664
  %v672 = vadd.f32 %v625, %v664
  %v673 = vadd.f32 %v626, %v664
  %v674 = vadd.f32 %v627, %v664
  %v675 = vadd.f32 %v628, %v664
  %v676 = vadd.f32 %v629, %v664
  %v677 = vadd.f32 %v630, %v664
  %v678 = vadd.f32 %v631, %v664
  %v679 = vadd.f32 %v632, %v664
  %v680 = vadd.f32 %v633, %v664
  %v681 = vadd.f32 %v634, %v664
  %v682 = vadd.f32 %v635, %v664
  %v683 = vadd.f32 %v636, %v664
  %v684 = vadd.f32 %v637, %v664
  %v685 = vadd.f32 %v638, %v664
  %v686 = vadd.f32 %v639, %v664
  %v687 = vadd.f32 %v640, %v664
  %v688 = vadd.f32 %v641, %v664
  %v689 = vadd.f32 %v642, %v664
  %v690 = vadd.f32 %v643, %v664
  %v691 = vadd.f32 %v644, %v664
  %v692 = vadd.f32 %v645, %v664
  %v693 = vadd.f32 %v646, %v664
  %v694 = vadd.f32 %v647, %v664
  %v695 = vadd.f32 %v648, %v664
  %v696 = vadd.f32 %v649, %v664
  %v697 = vadd.f32 %v650, %v664
  %v698 = vadd.f32 %v651, %v664
  %v699 = vadd.f32 %v652, %v664
  %v700 = vadd.f32 %v653, %v664
  %v701 = vadd.f32 %v654, %v664
  %v702 = vadd.f32 %v655, %v664
  %v703 = vadd.f32 %v656, %v664
  %v704 = vadd.f32 %v657, %v664
  %v705 = vadd.f32 %v658, %v664
  %v706 = vadd.f32 %v659, %v664
  %v707 = vadd.f32 %v660, %v664
  %vm708 = vcmp.gt.f32.partialorder %v665, 0.0
  %vm709 = vcmp.gt.f32.partialorder %v666, 0.0
  %vm710 = vcmp.gt.f32.partialorder %v667, 0.0
  %vm711 = vcmp.gt.f32.partialorder %v668, 0.0
  %vm712 = vcmp.gt.f32.partialorder %v669, 0.0
  %vm713 = vcmp.gt.f32.partialorder %v670, 0.0
  %vm714 = vcmp.gt.f32.partialorder %v671, 0.0
  %vm715 = vcmp.gt.f32.partialorder %v672, 0.0
  %vm716 = vcmp.gt.f32.partialorder %v673, 0.0
  %vm717 = vcmp.gt.f32.partialorder %v674, 0.0
  %vm718 = vcmp.gt.f32.partialorder %v675, 0.0
  %vm719 = vcmp.gt.f32.partialorder %v676, 0.0
  %vm720 = vcmp.gt.f32.partialorder %v677, 0.0
  %vm721 = vcmp.gt.f32.partialorder %v678, 0.0
  %vm722 = vcmp.gt.f32.partialorder %v679, 0.0
  %vm723 = vcmp.gt.f32.partialorder %v680, 0.0
  %vm724 = vcmp.gt.f32.partialorder %v681, 0.0
  %vm725 = vcmp.gt.f32.partialorder %v682, 0.0
  %vm726 = vcmp.gt.f32.partialorder %v683, 0.0
  %vm727 = vcmp.gt.f32.partialorder %v684, 0.0
  %vm728 = vcmp.gt.f32.partialorder %v685, 0.0
  %vm729 = vcmp.gt.f32.partialorder %v686, 0.0
  %vm730 = vcmp.gt.f32.partialorder %v687, 0.0
  %vm731 = vcmp.gt.f32.partialorder %v688, 0.0
  %vm732 = vcmp.gt.f32.partialorder %v689, 0.0
  %vm733 = vcmp.gt.f32.partialorder %v690, 0.0
  %vm734 = vcmp.gt.f32.partialorder %v691, 0.0
  %vm735 = vcmp.gt.f32.partialorder %v692, 0.0
  %vm736 = vcmp.gt.f32.partialorder %v693, 0.0
  %vm737 = vcmp.gt.f32.partialorder %v694, 0.0
  %vm738 = vcmp.gt.f32.partialorder %v695, 0.0
  %vm739 = vcmp.gt.f32.partialorder %v696, 0.0
  %vm740 = vcmp.gt.f32.partialorder %v697, 0.0
  %vm741 = vcmp.gt.f32.partialorder %v698, 0.0
  %vm742 = vcmp.gt.f32.partialorder %v699, 0.0
  %vm743 = vcmp.gt.f32.partialorder %v700, 0.0
  %vm744 = vcmp.gt.f32.partialorder %v701, 0.0
  %vm745 = vcmp.gt.f32.partialorder %v702, 0.0
  %vm746 = vcmp.gt.f32.partialorder %v703, 0.0
  %vm747 = vcmp.gt.f32.partialorder %v704, 0.0
  %vm748 = vcmp.gt.f32.partialorder %v705, 0.0
  %vm749 = vcmp.gt.f32.partialorder %v706, 0.0
  %vm750 = vcmp.gt.f32.partialorder %v707, 0.0
  %v751 = vmul.f32 %v665, 0.2
  %v752 = vmul.f32 %v666, 0.2
  %v753 = vmul.f32 %v667, 0.2
  %v754 = vmul.f32 %v668, 0.2
  %v755 = vmul.f32 %v669, 0.2
  %v756 = vmul.f32 %v670, 0.2
  %v757 = vmul.f32 %v671, 0.2
  %v758 = vmul.f32 %v672, 0.2
  %v759 = vmul.f32 %v673, 0.2
  %v760 = vmul.f32 %v674, 0.2
  %v761 = vmul.f32 %v675, 0.2
  %v762 = vmul.f32 %v676, 0.2
  %v763 = vmul.f32 %v677, 0.2
  %v764 = vmul.f32 %v678, 0.2
  %v765 = vmul.f32 %v679, 0.2
  %v766 = vmul.f32 %v680, 0.2
  %v767 = vmul.f32 %v681, 0.2
  %v768 = vmul.f32 %v682, 0.2
  %v769 = vmul.f32 %v683, 0.2
  %v770 = vmul.f32 %v684, 0.2
  %v771 = vmul.f32 %v685, 0.2
  %v772 = vmul.f32 %v686, 0.2
  %v773 = vmul.f32 %v687, 0.2
  %v774 = vmul.f32 %v688, 0.2
  %v775 = vmul.f32 %v689, 0.2
  %v776 = vmul.f32 %v690, 0.2
  %v777 = vmul.f32 %v691, 0.2
  %v778 = vmul.f32 %v692, 0.2
  %v779 = vmul.f32 %v693, 0.2
  %v780 = vmul.f32 %v694, 0.2
  %v781 = vmul.f32 %v695, 0.2
  %v782 = vmul.f32 %v696, 0.2
  %v783 = vmul.f32 %v697, 0.2
  %v784 = vmul.f32 %v698, 0.2
  %v785 = vmul.f32 %v699, 0.2
  %v786 = vmul.f32 %v700, 0.2
  %v787 = vmul.f32 %v701, 0.2
  %v788 = vmul.f32 %v702, 0.2
  %v789 = vmul.f32 %v703, 0.2
  %v790 = vmul.f32 %v704, 0.2
  %v791 = vmul.f32 %v705, 0.2
  %v792 = vmul.f32 %v706, 0.2
  %v793 = vmul.f32 %v707, 0.2
  %v794 = vsel %vm708, %v665, %v751
  %v795 = vsel %vm709, %v666, %v752
  %v796 = vsel %vm710, %v667, %v753
  %v797 = vsel %vm711, %v668, %v754
  %v798 = vsel %vm712, %v669, %v755
  %v799 = vsel %vm713, %v670, %v756
  %v800 = vsel %vm714, %v671, %v757
  %v801 = vsel %vm715, %v672, %v758
  %v802 = vsel %vm716, %v673, %v759
  %v803 = vsel %vm717, %v674, %v760
  %v804 = vsel %vm718, %v675, %v761
  %v805 = vsel %vm719, %v676, %v762
  %v806 = vsel %vm720, %v677, %v763
  %v807 = vsel %vm721, %v678, %v764
  %v808 = vsel %vm722, %v679, %v765
  %v809 = vsel %vm723, %v680, %v766
  %v810 = vsel %vm724, %v681, %v767
  %v811 = vsel %vm725, %v682, %v768
  %v812 = vsel %vm726, %v683, %v769
  %v813 = vsel %vm727, %v684, %v770
  %v814 = vsel %vm728, %v685, %v771
  %v815 = vsel %vm729, %v686, %v772
  %v816 = vsel %vm730, %v687, %v773
  %v817 = vsel %vm731, %v688, %v774
  %v818 = vsel %vm732, %v689, %v775
  %v819 = vsel %vm733, %v690, %v776
  %v820 = vsel %vm734, %v691, %v777
  %v821 = vsel %vm735, %v692, %v778
  %v822 = vsel %vm736, %v693, %v779
  %v823 = vsel %vm737, %v694, %v780
  %v824 = vsel %vm738, %v695, %v781
  %v825 = vsel %vm739, %v696, %v782
  %v826 = vsel %vm740, %v697, %v783
  %v827 = vsel %vm741, %v698, %v784
  %v828 = vsel %vm742, %v699, %v785
  %v829 = vsel %vm743, %v700, %v786
  %v830 = vsel %vm744, %v701, %v787
  %v831 = vsel %vm745, %v702, %v788
  %v832 = vsel %vm746, %v703, %v789
  %v833 = vsel %vm747, %v704, %v790
  %v834 = vsel %vm748, %v705, %v791
  %v835 = vsel %vm749, %v706, %v792
  %v836 = vsel %vm750, %v707, %v793
  %837 = vst [vmem:[%s3] sm:$0xff] %v794
  %838 = vst [vmem:[%s3 + $0x8] sm:$0xff] %v795
  %839 = vst [vmem:[%s3 + $0x10] sm:$0xff] %v796
  %840 = vst [vmem:[%s3 + $0x18] sm:$0xff] %v797
  %841 = vst [vmem:[%s3 + $0x20] sm:$0xff] %v798
  %842 = vst [vmem:[%s3 + $0x28] sm:$0xff] %v799
  %843 = vst [vmem:[%s3 + $0x30] sm:$0xff] %v800
  %844 = vst [vmem:[%s3 + $0x38] sm:$0xff] %v801
  %845 = vst [vmem:[%s3 + $0x40] sm:$0xff] %v802
  %846 = vst [vmem:[%s3 + $0x48] sm:$0xff] %v803
  %847 = vst [vmem:[%s3 + $0x50] sm:$0xff] %v804
  %848 = vst [vmem:[%s3 + $0x58] sm:$0xff] %v805
  %849 = vst [vmem:[%s3 + $0x60] sm:$0xff] %v806
  %850 = vst [vmem:[%s3 + $0x68] sm:$0xff] %v807
  %851 = vst [vmem:[%s3 + $0x70] sm:$0xff] %v808
  %852 = vst [vmem:[%s3 + $0x78] sm:$0xff] %v809
  %853 = vst [vmem:[%s3 + $0x80] sm:$0xff] %v810
  %854 = vst [vmem:[%s3 + $0x88] sm:$0xff] %v811
  %855 = vst [vmem:[%s3 + $0x90] sm:$0xff] %v812
  %856 = vst [vmem:[%s3 + $0x98] sm:$0xff] %v813
  %857 = vst [vmem:[%s3 + $0xa0] sm:$0xff] %v814
  %858 = vst [vmem:[%s3 + $0xa8] sm:$0xff] %v815
  %859 = vst [vmem:[%s3 + $0xb0] sm:$0xff] %v816
  %860 = vst [vmem:[%s3 + $0xb8] sm:$0xff] %v817
  %861 = vst [vmem:[%s3 + $0xc0] sm:$0xff] %v818
  %862 = vst [vmem:[%s3 + $0xc8] sm:$0xff] %v819
  %863 = vst [vmem:[%s3 + $0xd0] sm:$0xff] %v820
  %864 = vst [vmem:[%s3 + $0xd8] sm:$0xff] %v821
  %865 = vst [vmem:[%s3 + $0xe0] sm:$0xff] %v822
  %866 = vst [vmem:[%s3 + $0xe8] sm:$0xff] %v823
  %867 = vst [vmem:[%s3 + $0xf0] sm:$0xff] %v824
  %868 = vst [vmem:[%s3 + $0xf8] sm:$0xff] %v825
  %869 = vst [vmem:[%s3 + $0x100] sm:$0xff] %v826
  %870 = vst [vmem:[%s3 + $0x108] sm:$0xff] %v827
  %871 = vst [vmem:[%s3 + $0x110] sm:$0xff] %v828
  %872 = vst [vmem:[%s3 + $0x118] sm:$0xff] %v829
  %873 = vst [vmem:[%s3 + $0x120] sm:$0xff] %v830
  %874 = vst [vmem:[%s3 + $0x128] sm:$0xff] %v831
  %875 = vst [vmem:[%s3 + $0x130] sm:$0xff] %v832
  %876 = vst [vmem:[%s3 + $0x138] sm:$0xff] %v833
  %877 = vst [vmem:[%s3 + $0x140] sm:$0xff] %v834
  %878 = vst [vmem:[%s3 + $0x148] sm:$0xff] %v835
  %879 = vst [vmem:[%s3 + $0x150] sm:$0x3] %v836
  // Predicated region
  $region14: #{discriminator_forward.3} parent=0 // pred_check
    _
  $region15: #{discriminator_forward.3} parent=0 // pred_check_branch
    %881 = sbr.rel (0) target = $region17
  $region16: #{discriminator_forward.3} parent=0 // pred_region
    _
  $region17: #{discriminator_forward.3} parent=0 // pred_fallthru
    _
  // Predicated region
  $region18: #{discriminator_forward.3} parent=0 // pred_check
    _
  $region19: #{discriminator_forward.3} parent=0 // pred_check_branch
    %883 = sbr.rel (0) target = $region21
  $region20: #{discriminator_forward.3} parent=0 // pred_region
    _
  $region21: #{discriminator_forward.3} parent=0 // pred_fallthru
    _

// kernel: discriminator_forward.4
$region0: #{discriminator_forward.4}
  #allocation0 [shape = 'u32[]', space=smem, size = 0x4, offset = 0x4, fixed_abs, tag = 'smem constant byte address 0x4 - core index']
  #allocation1 [shape = 'u32[144,128]{1,0:T(1,128)}', space=vmem, size = 0x12000, scoped, tag = 'internal scratch']
  %s0 = inlined_call_operand.vmem [shape: bf16[50,400], index: 0, kind: input, shape index: {}]
  %s1 = inlined_call_operand.vmem [shape: bf16[400,128], index: 1, kind: input, shape index: {}]
  %s2 = inlined_call_operand.vmem [shape: f32[3,128], index: 2, kind: input, shape index: {}]
  %s3 = inlined_call_operand.vmem [shape: f32[50,128], index: 3, kind: output, shape index: {}]
  %s4 = sld [smem:[#allocation0]]
  $region22: #{discriminator_forward.4} parent=0
    _
  %s6 = ssub.s32 1, %s4
  %s7 = scalar_select 0, %s6, %s4
  // Predicated region
  $region2: #{discriminator_forward.4} parent=0 // pred_check
    _
  $region3: #{discriminator_forward.4} parent=0 // pred_check_branch
    %9 = sbr.rel (0) target = $region5
  $region4: #{discriminator_forward.4} parent=0 // pred_region
    _
  $region5: #{discriminator_forward.4} parent=0 // pred_fallthru
    _
  // Predicated region
  $region6: #{discriminator_forward.4} parent=0 // pred_check
    _
  $region7: #{discriminator_forward.4} parent=0 // pred_check_branch
    %11 = sbr.rel (0) target = $region9
  $region8: #{discriminator_forward.4} parent=0 // pred_region
    _
  $region9: #{discriminator_forward.4} parent=0 // pred_fallthru
    _
  // Predicated region
  $region10: #{discriminator_forward.4} parent=0 // pred_check
    _
  $region11: #{discriminator_forward.4} parent=0 // pred_check_branch
    %13 = sbr.rel (0) target = $region13
  $region12: #{discriminator_forward.4} parent=0 // pred_region
    _
  $region13: #{discriminator_forward.4} parent=0 // pred_fallthru
    _
  %v15 = vld [vmem:[%s0] sm:$0xff]
  %v16 = vld [vmem:[%s0 + $0x8] sm:$0xff]
  %v17 = vld [vmem:[%s0 + $0x10] sm:$0xff]
  %v18 = vld [vmem:[%s0 + $0x18] sm:$0xff]
  %v19 = vld [vmem:[%s0 + $0x20] sm:$0xff]
  %v20 = vld [vmem:[%s0 + $0x28] sm:$0xff]
  %v21 = vld [vmem:[%s0 + $0x30] sm:$0xff]
  %v22 = vld [vmem:[%s0 + $0x38] sm:$0xff]
  %v23 = vld [vmem:[%s0 + $0x40] sm:$0xff]
  %v24 = vld [vmem:[%s0 + $0x48] sm:$0xff]
  %v25 = vld [vmem:[%s0 + $0x50] sm:$0xff]
  %v26 = vld [vmem:[%s0 + $0x58] sm:$0xff]
  %v27 = vld [vmem:[%s0 + $0x60] sm:$0x11]
  %v28 = vld [vmem:[%s0 + $0x68] sm:$0x11]
  %v29 = vld [vmem:[%s1] sm:$0xf]
  %v30 = vld [vmem:[%s1 + $0x4] sm:$0xf]
  %v31 = vld [vmem:[%s1 + $0x8] sm:$0xf]
  %v32 = vld [vmem:[%s1 + $0xc] sm:$0xf]
  %v33 = vld [vmem:[%s1 + $0x10] sm:$0xf]
  %v34 = vld [vmem:[%s1 + $0x14] sm:$0xf]
  %v35 = vld [vmem:[%s1 + $0x18] sm:$0xf]
  %v36 = vld [vmem:[%s1 + $0x1c] sm:$0xf]
  %v37 = vld [vmem:[%s1 + $0x20] sm:$0xf]
  %v38 = vld [vmem:[%s1 + $0x24] sm:$0xf]
  %v39 = vld [vmem:[%s1 + $0x28] sm:$0xf]
  %v40 = vld [vmem:[%s1 + $0x2c] sm:$0xf]
  %v41 = vld [vmem:[%s1 + $0x30] sm:$0xf]
  %v42 = vld [vmem:[%s1 + $0x34] sm:$0xf]
  %v43 = vld [vmem:[%s1 + $0x38] sm:$0xf]
  %v44 = vld [vmem:[%s1 + $0x3c] sm:$0xf]
  %v45 = vld [vmem:[%s1 + $0x40] sm:$0xf]
  %v46 = vld [vmem:[%s1 + $0x44] sm:$0xf]
  %v47 = vld [vmem:[%s1 + $0x48] sm:$0xf]
  %v48 = vld [vmem:[%s1 + $0x4c] sm:$0xf]
  %v49 = vld [vmem:[%s1 + $0x50] sm:$0xf]
  %v50 = vld [vmem:[%s1 + $0x54] sm:$0xf]
  %v51 = vld [vmem:[%s1 + $0x58] sm:$0xf]
  %v52 = vld [vmem:[%s1 + $0x5c] sm:$0xf]
  %v53 = vld [vmem:[%s1 + $0x60] sm:$0xf]
  %v54 = vld [vmem:[%s1 + $0x64] sm:$0xf]
  %v55 = vld [vmem:[%s1 + $0x68] sm:$0xf]
  %v56 = vld [vmem:[%s1 + $0x6c] sm:$0xf]
  %v57 = vld [vmem:[%s1 + $0x70] sm:$0xf]
  %v58 = vld [vmem:[%s1 + $0x74] sm:$0xf]
  %v59 = vld [vmem:[%s1 + $0x78] sm:$0xf]
  %v60 = vld [vmem:[%s1 + $0x7c] sm:$0xf]
  %v61 = vld [vmem:[%s1 + $0x80] sm:$0xf]
  %v62 = vld [vmem:[%s1 + $0x84] sm:$0xf]
  %v63 = vld [vmem:[%s1 + $0x88] sm:$0xf]
  %v64 = vld [vmem:[%s1 + $0x8c] sm:$0xf]
  %v65 = vld [vmem:[%s1 + $0x90] sm:$0xf]
  %v66 = vld [vmem:[%s1 + $0x94] sm:$0xf]
  %v67 = vld [vmem:[%s1 + $0x98] sm:$0xf]
  %v68 = vld [vmem:[%s1 + $0x9c] sm:$0xf]
  %v69 = vld [vmem:[%s1 + $0xa0] sm:$0xf]
  %v70 = vld [vmem:[%s1 + $0xa4] sm:$0xf]
  %v71 = vld [vmem:[%s1 + $0xa8] sm:$0xf]
  %v72 = vld [vmem:[%s1 + $0xac] sm:$0xf]
  %v73 = vld [vmem:[%s1 + $0xb0] sm:$0xf]
  %v74 = vld [vmem:[%s1 + $0xb4] sm:$0xf]
  %v75 = vld [vmem:[%s1 + $0xb8] sm:$0xf]
  %v76 = vld [vmem:[%s1 + $0xbc] sm:$0xf]
  %v77 = vld [vmem:[%s1 + $0xc0] sm:$0xf]
  %v78 = vld [vmem:[%s1 + $0xc4] sm:$0xf]
  %v79 = vld [vmem:[%s2] sm:$0x1]
  %v80 = vlaneseq
  %v81 = vshrl.u32 %v80, 7
  %v82 = vsub.s32 0, %v81
  %v83 = vrot.slane %v79, %v82
  %v98 = vunpack.c.l.b16 %v15
  %v99 = vunpack.c.h.b16 %v15
  %v100 = vunpack.c.l.b16 %v16
  %v101 = vunpack.c.h.b16 %v16
  %v102 = vunpack.c.l.b16 %v17
  %v103 = vunpack.c.h.b16 %v17
  %v104 = vunpack.c.l.b16 %v18
  %v105 = vunpack.c.h.b16 %v18
  %v106 = vunpack.c.l.b16 %v19
  %v107 = vunpack.c.h.b16 %v19
  %v108 = vunpack.c.l.b16 %v20
  %v109 = vunpack.c.h.b16 %v20
  %v110 = vunpack.c.l.b16 %v21
  %v111 = vunpack.c.h.b16 %v21
  %v112 = vunpack.c.l.b16 %v22
  %v113 = vunpack.c.h.b16 %v22
  %v114 = vunpack.c.l.b16 %v23
  %v115 = vunpack.c.h.b16 %v23
  %v116 = vunpack.c.l.b16 %v24
  %v117 = vunpack.c.h.b16 %v24
  %v118 = vunpack.c.l.b16 %v25
  %v119 = vunpack.c.h.b16 %v25
  %v120 = vunpack.c.l.b16 %v26
  %v121 = vunpack.c.h.b16 %v26
  %v122 = vunpack.c.l.b16 %v27
  %v123 = vunpack.c.h.b16 %v27
  %v124 = vunpack.c.l.b16 %v28
  %v125 = vunpack.c.h.b16 %v28
  %v126 = vpack.c.b16 %v102, %v98
  %v127 = vpack.c.b16 %v103, %v99
  %v128 = vpack.c.b16 %v104, %v100
  %v129 = vpack.c.b16 %v105, %v101
  %v130 = vpack.c.b16 %v110, %v106
  %v131 = vpack.c.b16 %v111, %v107
  %v132 = vpack.c.b16 %v112, %v108
  %v133 = vpack.c.b16 %v113, %v109
  %v134 = vpack.c.b16 %v118, %v114
  %v135 = vpack.c.b16 %v119, %v115
  %v136 = vpack.c.b16 %v120, %v116
  %v137 = vpack.c.b16 %v121, %v117
  %v138 = vpack.c.b16 %v122, %v122
  %v139 = vpack.c.b16 %v123, %v123
  %v140 = vpack.c.b16 %v124, %v124
  %v141 = vpack.c.b16 %v125, %v125
  %v204 = vunpack.c.l.b16 %v29
  %v205 = vunpack.c.l.b16 %v30
  %v206 = vunpack.c.l.b16 %v31
  %v207 = vunpack.c.l.b16 %v32
  %v208 = vunpack.c.l.b16 %v33
  %v209 = vunpack.c.l.b16 %v34
  %v210 = vunpack.c.l.b16 %v35
  %v211 = vunpack.c.l.b16 %v36
  %v212 = vunpack.c.l.b16 %v37
  %v213 = vunpack.c.l.b16 %v38
  %v214 = vunpack.c.l.b16 %v39
  %v215 = vunpack.c.l.b16 %v40
  %v216 = vunpack.c.l.b16 %v41
  %v217 = vunpack.c.l.b16 %v42
  %v218 = vunpack.c.l.b16 %v43
  %v219 = vunpack.c.l.b16 %v44
  %v220 = vunpack.c.l.b16 %v45
  %v221 = vunpack.c.l.b16 %v46
  %v222 = vunpack.c.l.b16 %v47
  %v223 = vunpack.c.l.b16 %v48
  %v224 = vunpack.c.l.b16 %v49
  %v225 = vunpack.c.l.b16 %v50
  %v226 = vunpack.c.l.b16 %v51
  %v227 = vunpack.c.l.b16 %v52
  %v228 = vunpack.c.l.b16 %v53
  %v229 = vunpack.c.l.b16 %v54
  %v230 = vunpack.c.l.b16 %v55
  %v231 = vunpack.c.l.b16 %v56
  %v232 = vunpack.c.l.b16 %v57
  %v233 = vunpack.c.l.b16 %v58
  %v234 = vunpack.c.l.b16 %v59
  %v235 = vunpack.c.l.b16 %v60
  %v236 = vunpack.c.l.b16 %v61
  %v237 = vunpack.c.l.b16 %v62
  %v238 = vunpack.c.l.b16 %v63
  %v239 = vunpack.c.l.b16 %v64
  %v240 = vunpack.c.l.b16 %v65
  %v241 = vunpack.c.l.b16 %v66
  %v242 = vunpack.c.l.b16 %v67
  %v243 = vunpack.c.l.b16 %v68
  %v244 = vunpack.c.l.b16 %v69
  %v245 = vunpack.c.l.b16 %v70
  %v246 = vunpack.c.l.b16 %v71
  %v247 = vunpack.c.l.b16 %v72
  %v248 = vunpack.c.l.b16 %v73
  %v249 = vunpack.c.l.b16 %v74
  %v250 = vunpack.c.l.b16 %v75
  %v251 = vunpack.c.l.b16 %v76
  %v252 = vunpack.c.l.b16 %v77
  %v253 = vunpack.c.l.b16 %v78
  %v254 = vpack.c.b16 %v205, %v204
  %v255 = vpack.c.b16 %v207, %v206
  %v256 = vpack.c.b16 %v209, %v208
  %v257 = vpack.c.b16 %v211, %v210
  %v258 = vpack.c.b16 %v213, %v212
  %v259 = vpack.c.b16 %v215, %v214
  %v260 = vpack.c.b16 %v217, %v216
  %v261 = vpack.c.b16 %v219, %v218
  %v262 = vpack.c.b16 %v221, %v220
  %v263 = vpack.c.b16 %v223, %v222
  %v264 = vpack.c.b16 %v225, %v224
  %v265 = vpack.c.b16 %v227, %v226
  %v266 = vpack.c.b16 %v229, %v228
  %v267 = vpack.c.b16 %v231, %v230
  %v268 = vpack.c.b16 %v233, %v232
  %v269 = vpack.c.b16 %v235, %v234
  %v270 = vpack.c.b16 %v237, %v236
  %v271 = vpack.c.b16 %v239, %v238
  %v272 = vpack.c.b16 %v241, %v240
  %v273 = vpack.c.b16 %v243, %v242
  %v274 = vpack.c.b16 %v245, %v244
  %v275 = vpack.c.b16 %v247, %v246
  %v276 = vpack.c.b16 %v249, %v248
  %v277 = vpack.c.b16 %v251, %v250
  %v278 = vpack.c.b16 %v253, %v252
  %vm304 = vcmask 130048
  %v306 = vsel %vm304, %v129, 0
  %v309 = vsel %vm304, %v133, 0
  %v312 = vsel %vm304, %v137, 0
  %v315 = vsel %vm304, %v141, 0
  %317 = vmatprep.subr.bf16.mxu0 0
  %318 = vmatpush1.bf16.msra.mxu0 %v254
  %319 = vmatprep.subr.bf16.mxu0 0
  %320 = vmatpush1.bf16.msra.mxu0 %v255
  %321 = vmatprep.subr.bf16.mxu0 0
  %322 = vmatpush1.bf16.msra.mxu0 %v256
  %323 = vmatprep.subr.bf16.mxu0 0
  %324 = vmatpush1.bf16.msra.mxu0 %v257
  %325 = vmatprep.subr.bf16.mxu0 0
  %326 = vmatpush1.bf16.msra.mxu0 %v258
  %327 = vmatprep.subr.bf16.mxu0 0
  %328 = vmatpush1.bf16.msra.mxu0 %v259
  %329 = vmatprep.subr.bf16.mxu0 0
  %330 = vmatpush1.bf16.msra.mxu0 %v260
  %331 = vmatprep.subr.bf16.mxu0 0
  %332 = vmatpush1.bf16.msra.mxu0 %v261
  %333 = vmatprep.subr.bf16.mxu0 0
  %334 = vmatpush1.bf16.msra.mxu0 %v262
  %335 = vmatprep.subr.bf16.mxu0 0
  %336 = vmatpush1.bf16.msra.mxu0 %v263
  %337 = vmatprep.subr.bf16.mxu0 0
  %338 = vmatpush1.bf16.msra.mxu0 %v264
  %339 = vmatprep.subr.bf16.mxu0 0
  %340 = vmatpush1.bf16.msra.mxu0 %v265
  %341 = vmatprep.subr.bf16.mxu0 0
  %342 = vmatpush1.bf16.msra.mxu0 %v266
  %343 = vmatprep.subr.bf16.mxu0 0
  %344 = vmatpush1.bf16.msra.mxu0 %v267
  %345 = vmatprep.subr.bf16.mxu0 0
  %346 = vmatpush1.bf16.msra.mxu0 %v268
  %347 = vmatprep.subr.bf16.mxu0 0
  %348 = vmatpush1.bf16.msra.mxu0 %v269
  %349 = vmatprep.mubr.bf16.mxu0 %v127
  %350 = vmatmul.mubr.bf16.gmra.mrb[0].mxu0 %v126
  %v351 = vpop.f32.mrb[0].mxu0
  %v352 = vadd.f32 %v83, %v351
  %v353 = vpop.f32.mrb[0].mxu0
  %v354 = vpop.f32.mrb[0].mxu0
  %v355 = vadd.f32 %v83, %v354
  %v356 = vpop.f32.mrb[0].mxu0
  %357 = vmatprep.mubr.bf16.mxu0 %v131
  %358 = vmatmul.mubr.bf16.gmra.mrb[0].mxu0 %v130
  %v359 = vpop.f32.mrb[0].mxu0
  %v360 = vadd.f32 %v83, %v359
  %v361 = vpop.f32.mrb[0].mxu0
  %v362 = vpop.f32.mrb[0].mxu0
  %v363 = vadd.f32 %v83, %v362
  %v364 = vpop.f32.mrb[0].mxu0
  %365 = vmatprep.mubr.bf16.mxu0 %v135
  %366 = vmatmul.mubr.bf16.gmra.mrb[0].mxu0 %v134
  %v367 = vpop.f32.mrb[0].mxu0
  %v368 = vadd.f32 %v83, %v367
  %v369 = vpop.f32.mrb[0].mxu0
  %v370 = vpop.f32.mrb[0].mxu0
  %v371 = vadd.f32 %v83, %v370
  %v372 = vpop.f32.mrb[0].mxu0
  %373 = vmatprep.mubr.bf16.mxu0 %v139
  %374 = vmatmul.mubr.bf16.gmra.mrb[0].mxu0 %v138
  %v375 = vpop.f32.mrb[0].mxu0
  %v376 = vadd.f32 %v83, %v375
  %v377 = vpop.f32.mrb[0].mxu0
  %v378 = vpop.f32.mrb[0].mxu0
  %v379 = vpop.f32.mrb[0].mxu0
  %380 = vdwg.mxu0
  %381 = vmatprep.subr.bf16.mxu0 0
  %382 = vmatpush1.bf16.msra.mxu0 %v270
  %383 = vmatprep.subr.bf16.mxu0 0
  %384 = vmatpush1.bf16.msra.mxu0 %v271
  %385 = vmatprep.subr.bf16.mxu0 0
  %386 = vmatpush1.bf16.msra.mxu0 %v272
  %387 = vmatprep.subr.bf16.mxu0 0
  %388 = vmatpush1.bf16.msra.mxu0 %v273
  %389 = vmatprep.subr.bf16.mxu0 0
  %390 = vmatpush1.bf16.msra.mxu0 %v274
  %391 = vmatprep.subr.bf16.mxu0 0
  %392 = vmatpush1.bf16.msra.mxu0 %v275
  %393 = vmatprep.subr.bf16.mxu0 0
  %394 = vmatpush1.bf16.msra.mxu0 %v276
  %395 = vmatprep.subr.bf16.mxu0 0
  %396 = vmatpush1.bf16.msra.mxu0 %v277
  %397 = vmatprep.subr.bf16.mxu0 0
  %398 = vmatpush1.bf16.msra.mxu0 %v278
  %399 = vmatprep.subr.bf16.mxu0 0
  %400 = vmatpush1.bf16.msra.mxu0 0
  %401 = vmatprep.subr.bf16.mxu0 0
  %402 = vmatpush1.bf16.msra.mxu0 0
  %403 = vmatprep.subr.bf16.mxu0 0
  %404 = vmatpush1.bf16.msra.mxu0 0
  %405 = vmatprep.subr.bf16.mxu0 0
  %406 = vmatpush1.bf16.msra.mxu0 0
  %407 = vmatprep.subr.bf16.mxu0 0
  %408 = vmatpush1.bf16.msra.mxu0 0
  %409 = vmatprep.subr.bf16.mxu0 0
  %410 = vmatpush1.bf16.msra.mxu0 0
  %411 = vmatprep.subr.bf16.mxu0 0
  %412 = vmatpush1.bf16.msra.mxu0 0
  %413 = vmatprep.mubr.bf16.mxu0 %v306
  %414 = vmatmul.mubr.bf16.gmra.mrb[0].mxu0 %v128
  %v415 = vpop.f32.mrb[0].mxu0
  %v416 = vadd.f32 %v352, %v415
  %v417 = vpop.f32.mrb[0].mxu0
  %v418 = vpop.f32.mrb[0].mxu0
  %v419 = vadd.f32 %v355, %v418
  %v420 = vpop.f32.mrb[0].mxu0
  %421 = vmatprep.mubr.bf16.mxu0 %v309
  %422 = vmatmul.mubr.bf16.gmra.mrb[0].mxu0 %v132
  %v423 = vpop.f32.mrb[0].mxu0
  %v424 = vadd.f32 %v360, %v423
  %v425 = vpop.f32.mrb[0].mxu0
  %v426 = vpop.f32.mrb[0].mxu0
  %v427 = vadd.f32 %v363, %v426
  %v428 = vpop.f32.mrb[0].mxu0
  %429 = vmatprep.mubr.bf16.mxu0 %v312
  %430 = vmatmul.mubr.bf16.gmra.mrb[0].mxu0 %v136
  %v431 = vpop.f32.mrb[0].mxu0
  %v432 = vadd.f32 %v368, %v431
  %v433 = vpop.f32.mrb[0].mxu0
  %v434 = vpop.f32.mrb[0].mxu0
  %v435 = vadd.f32 %v371, %v434
  %v436 = vpop.f32.mrb[0].mxu0
  %437 = vmatprep.mubr.bf16.mxu0 %v315
  %438 = vmatmul.mubr.bf16.gmra.mrb[0].mxu0 %v140
  %v439 = vpop.f32.mrb[0].mxu0
  %v440 = vadd.f32 %v376, %v439
  %v441 = vpop.f32.mrb[0].mxu0
  %v442 = vpop.f32.mrb[0].mxu0
  %v443 = vpop.f32.mrb[0].mxu0
  %444 = vdwg.mxu0
  %v445 = vadd.f32 %v416, %v419
  %v446 = vadd.f32 %v445, %v424
  %v447 = vadd.f32 %v446, %v427
  %v448 = vadd.f32 %v447, %v432
  %v449 = vadd.f32 %v448, %v435
  %vm450 = vcmask 1041408
  %v451 = vsel %vm450, %v440, 0.0
  %v452 = vadd.f32 %v449, %v451
  %v453 = vrot.slane %v452, 4
  %v454 = vadd.f32 %v452, %v453
  %v455 = vrot.slane %v454, 2
  %v456 = vadd.f32 %v454, %v455
  %v457 = vrot.slane %v456, 1
  %v458 = vadd.f32 %v456, %v457
  %v459 = vmul.f32 %v458, 0.02
  %v460 = vmul.f32 %v416, %v416
  %v461 = vmul.f32 %v419, %v419
  %v462 = vmul.f32 %v424, %v424
  %v463 = vmul.f32 %v427, %v427
  %v464 = vmul.f32 %v432, %v432
  %v465 = vmul.f32 %v435, %v435
  %v466 = vmul.f32 %v440, %v440
  %v467 = vadd.f32 %v460, %v461
  %v468 = vadd.f32 %v467, %v462
  %v469 = vadd.f32 %v468, %v463
  %v470 = vadd.f32 %v469, %v464
  %v471 = vadd.f32 %v470, %v465
  %v472 = vsel %vm450, %v466, 0.0
  %v473 = vadd.f32 %v471, %v472
  %v474 = vrot.slane %v473, 4
  %v475 = vadd.f32 %v473, %v474
  %v476 = vrot.slane %v475, 2
  %v477 = vadd.f32 %v475, %v476
  %v478 = vrot.slane %v477, 1
  %v479 = vadd.f32 %v477, %v478
  %v480 = vmul.f32 %v479, 0.02
  %v481 = vmul.f32 %v459, %v459
  %v482 = vsub.f32 %v480, %v481
  %v483 = vmax.f32 %v482, 0.0
  %v484 = vld [vmem:[%s2 + $0x1] sm:$0x1]
  %v485 = vadd.f32 %v483, 1e-05
  %v486 = vrsqrt.pop %v485
  %v487 = vmul.f32 %v484, %v486
  %v488 = vld [vmem:[%s2 + $0x2] sm:$0x1]
  %v489 = vmul.f32 %v459, %v487
  %v490 = vsub.f32 %v488, %v489
  %v491 = vlaneseq
  %v492 = vshrl.u32 %v491, 7
  %v493 = vsub.s32 0, %v492
  %v494 = vrot.slane %v487, %v493
  %v495 = vmul.f32 %v416, %v494
  %v496 = vmul.f32 %v419, %v494
  %v497 = vmul.f32 %v424, %v494
  %v498 = vmul.f32 %v427, %v494
  %v499 = vmul.f32 %v432, %v494
  %v500 = vmul.f32 %v435, %v494
  %v501 = vmul.f32 %v440, %v494
  %v502 = vlaneseq
  %v503 = vshrl.u32 %v502, 7
  %v504 = vsub.s32 0, %v503
  %v505 = vrot.slane %v490, %v504
  %v506 = vadd.f32 %v495, %v505
  %v507 = vadd.f32 %v496, %v505
  %v508 = vadd.f32 %v497, %v505
  %v509 = vadd.f32 %v498, %v505
  %v510 = vadd.f32 %v499, %v505
  %v511 = vadd.f32 %v500, %v505
  %v512 = vadd.f32 %v501, %v505
  %vm513 = vcmp.gt.f32.partialorder %v506, 0.0
  %vm514 = vcmp.gt.f32.partialorder %v507, 0.0
  %vm515 = vcmp.gt.f32.partialorder %v508, 0.0
  %vm516 = vcmp.gt.f32.partialorder %v509, 0.0
  %vm517 = vcmp.gt.f32.partialorder %v510, 0.0
  %vm518 = vcmp.gt.f32.partialorder %v511, 0.0
  %vm519 = vcmp.gt.f32.partialorder %v512, 0.0
  %v520 = vmul.f32 %v506, 0.2
  %v521 = vmul.f32 %v507, 0.2
  %v522 = vmul.f32 %v508, 0.2
  %v523 = vmul.f32 %v509, 0.2
  %v524 = vmul.f32 %v510, 0.2
  %v525 = vmul.f32 %v511, 0.2
  %v526 = vmul.f32 %v512, 0.2
  %v527 = vsel %vm513, %v506, %v520
  %v528 = vsel %vm514, %v507, %v521
  %v529 = vsel %vm515, %v508, %v522
  %v530 = vsel %vm516, %v509, %v523
  %v531 = vsel %vm517, %v510, %v524
  %v532 = vsel %vm518, %v511, %v525
  %v533 = vsel %vm519, %v512, %v526
  %534 = vst [vmem:[%s3] sm:$0xff] %v527
  %535 = vst [vmem:[%s3 + $0x8] sm:$0xff] %v528
  %536 = vst [vmem:[%s3 + $0x10] sm:$0xff] %v529
  %537 = vst [vmem:[%s3 + $0x18] sm:$0xff] %v530
  %538 = vst [vmem:[%s3 + $0x20] sm:$0xff] %v531
  %539 = vst [vmem:[%s3 + $0x28] sm:$0xff] %v532
  %540 = vst [vmem:[%s3 + $0x30] sm:$0x3] %v533
  // Predicated region
  $region14: #{discriminator_forward.4} parent=0 // pred_check
    _
  $region15: #{discriminator_forward.4} parent=0 // pred_check_branch
    %542 = sbr.rel (0) target = $region17
  $region16: #{discriminator_forward.4} parent=0 // pred_region
    _
  $region17: #{discriminator_forward.4} parent=0 // pred_fallthru
    _
  // Predicated region
  $region18: #{discriminator_forward.4} parent=0 // pred_check
    _
  $region19: #{discriminator_forward.4} parent=0 // pred_check_branch
    %544 = sbr.rel (0) target = $region21
  $region20: #{discriminator_forward.4} parent=0 // pred_region
    _
  $region21: #{discriminator_forward.4} parent=0 // pred_fallthru
    _

// kernel: discriminator_forward.5
$region0: #{discriminator_forward.5}
  #allocation0 [shape = 'u32[]', space=smem, size = 0x4, offset = 0x4, fixed_abs, tag = 'smem constant byte address 0x4 - core index']
  #allocation1 [shape = 'u32[144,128]{1,0:T(1,128)}', space=vmem, size = 0x12000, scoped, tag = 'internal scratch']
  %s0 = inlined_call_operand.vmem [shape: bf16[2,800], index: 0, kind: input, shape index: {}]
  %s1 = inlined_call_operand.vmem [shape: bf16[800,128], index: 1, kind: input, shape index: {}]
  %s2 = inlined_call_operand.vmem [shape: f32[4,128], index: 2, kind: input, shape index: {}]
  %s3 = inlined_call_operand.vmem [shape: bf16[128,128], index: 3, kind: input, shape index: {}]
  %s4 = inlined_call_operand.vmem [shape: f32[2,128], index: 4, kind: output, shape index: {}]
  %s5 = sld [smem:[#allocation0]]
  $region26: #{discriminator_forward.5} parent=0
    _
  %s7 = ssub.s32 1, %s5
  %s8 = scalar_select 0, %s7, %s5
  // Predicated region
  $region2: #{discriminator_forward.5} parent=0 // pred_check
    _
  $region3: #{discriminator_forward.5} parent=0 // pred_check_branch
    %10 = sbr.rel (0) target = $region5
  $region4: #{discriminator_forward.5} parent=0 // pred_region
    _
  $region5: #{discriminator_forward.5} parent=0 // pred_fallthru
    _
  // Predicated region
  $region6: #{discriminator_forward.5} parent=0 // pred_check
    _
  $region7: #{discriminator_forward.5} parent=0 // pred_check_branch
    %12 = sbr.rel (0) target = $region9
  $region8: #{discriminator_forward.5} parent=0 // pred_region
    _
  $region9: #{discriminator_forward.5} parent=0 // pred_fallthru
    _
  // Predicated region
  $region10: #{discriminator_forward.5} parent=0 // pred_check
    _
  $region11: #{discriminator_forward.5} parent=0 // pred_check_branch
    %14 = sbr.rel (0) target = $region13
  $region12: #{discriminator_forward.5} parent=0 // pred_region
    _
  $region13: #{discriminator_forward.5} parent=0 // pred_fallthru
    _
  // Predicated region
  $region14: #{discriminator_forward.5} parent=0 // pred_check
    _
  $region15: #{discriminator_forward.5} parent=0 // pred_check_branch
    %16 = sbr.rel (0) target = $region17
  $region16: #{discriminator_forward.5} parent=0 // pred_region
    _
  $region17: #{discriminator_forward.5} parent=0 // pred_fallthru
    _
  %v18 = vld [vmem:[%s0] sm:$0x7f]
  %v19 = vld [vmem:[%s1] sm:$0xf]
  %v20 = vld [vmem:[%s1 + $0x4] sm:$0xf]
  %v21 = vld [vmem:[%s1 + $0x8] sm:$0xf]
  %v22 = vld [vmem:[%s1 + $0xc] sm:$0xf]
  %v23 = vld [vmem:[%s1 + $0x10] sm:$0xf]
  %v24 = vld [vmem:[%s1 + $0x14] sm:$0xf]
  %v25 = vld [vmem:[%s1 + $0x18] sm:$0xf]
  %v26 = vld [vmem:[%s1 + $0x1c] sm:$0xf]
  %v27 = vld [vmem:[%s1 + $0x20] sm:$0xf]
  %v28 = vld [vmem:[%s1 + $0x24] sm:$0xf]
  %v29 = vld [vmem:[%s1 + $0x28] sm:$0xf]
  %v30 = vld [vmem:[%s1 + $0x2c] sm:$0xf]
  %v31 = vld [vmem:[%s1 + $0x30] sm:$0xf]
  %v32 = vld [vmem:[%s1 + $0x34] sm:$0xf]
  %v33 = vld [vmem:[%s1 + $0x38] sm:$0xf]
  %v34 = vld [vmem:[%s1 + $0x3c] sm:$0xf]
  %v35 = vld [vmem:[%s1 + $0x40] sm:$0xf]
  %v36 = vld [vmem:[%s1 + $0x44] sm:$0xf]
  %v37 = vld [vmem:[%s1 + $0x48] sm:$0xf]
  %v38 = vld [vmem:[%s1 + $0x4c] sm:$0xf]
  %v39 = vld [vmem:[%s1 + $0x50] sm:$0xf]
  %v40 = vld [vmem:[%s1 + $0x54] sm:$0xf]
  %v41 = vld [vmem:[%s1 + $0x58] sm:$0xf]
  %v42 = vld [vmem:[%s1 + $0x5c] sm:$0xf]
  %v43 = vld [vmem:[%s1 + $0x60] sm:$0xf]
  %v44 = vld [vmem:[%s1 + $0x64] sm:$0xf]
  %v45 = vld [vmem:[%s1 + $0x68] sm:$0xf]
  %v46 = vld [vmem:[%s1 + $0x6c] sm:$0xf]
  %v47 = vld [vmem:[%s1 + $0x70] sm:$0xf]
  %v48 = vld [vmem:[%s1 + $0x74] sm:$0xf]
  %v49 = vld [vmem:[%s1 + $0x78] sm:$0xf]
  %v50 = vld [vmem:[%s1 + $0x7c] sm:$0xf]
  %v51 = vld [vmem:[%s1 + $0x80] sm:$0xf]
  %v52 = vld [vmem:[%s1 + $0x84] sm:$0xf]
  %v53 = vld [vmem:[%s1 + $0x88] sm:$0xf]
  %v54 = vld [vmem:[%s1 + $0x8c] sm:$0xf]
  %v55 = vld [vmem:[%s1 + $0x90] sm:$0xf]
  %v56 = vld [vmem:[%s1 + $0x94] sm:$0xf]
  %v57 = vld [vmem:[%s1 + $0x98] sm:$0xf]
  %v58 = vld [vmem:[%s1 + $0x9c] sm:$0xf]
  %v59 = vld [vmem:[%s1 + $0xa0] sm:$0xf]
  %v60 = vld [vmem:[%s1 + $0xa4] sm:$0xf]
  %v61 = vld [vmem:[%s1 + $0xa8] sm:$0xf]
  %v62 = vld [vmem:[%s1 + $0xac] sm:$0xf]
  %v63 = vld [vmem:[%s1 + $0xb0] sm:$0xf]
  %v64 = vld [vmem:[%s1 + $0xb4] sm:$0xf]
  %v65 = vld [vmem:[%s1 + $0xb8] sm:$0xf]
  %v66 = vld [vmem:[%s1 + $0xbc] sm:$0xf]
  %v67 = vld [vmem:[%s1 + $0xc0] sm:$0xf]
  %v68 = vld [vmem:[%s1 + $0xc4] sm:$0xf]
  %v69 = vld [vmem:[%s1 + $0xc8] sm:$0xf]
  %v70 = vld [vmem:[%s1 + $0xcc] sm:$0xf]
  %v71 = vld [vmem:[%s1 + $0xd0] sm:$0xf]
  %v72 = vld [vmem:[%s1 + $0xd4] sm:$0xf]
  %v73 = vld [vmem:[%s1 + $0xd8] sm:$0xf]
  %v74 = vld [vmem:[%s1 + $0xdc] sm:$0xf]
  %v75 = vld [vmem:[%s1 + $0xe0] sm:$0xf]
  %v76 = vld [vmem:[%s1 + $0xe4] sm:$0xf]
  %v77 = vld [vmem:[%s1 + $0xe8] sm:$0xf]
  %v78 = vld [vmem:[%s1 + $0xec] sm:$0xf]
  %v79 = vld [vmem:[%s1 + $0xf0] sm:$0xf]
  %v80 = vld [vmem:[%s1 + $0xf4] sm:$0xf]
  %v81 = vld [vmem:[%s1 + $0xf8] sm:$0xf]
  %v82 = vld [vmem:[%s1 + $0xfc] sm:$0xf]
  %v83 = vld [vmem:[%s1 + $0x100] sm:$0xf]
  %v84 = vld [vmem:[%s1 + $0x104] sm:$0xf]
  %v85 = vld [vmem:[%s1 + $0x108] sm:$0xf]
  %v86 = vld [vmem:[%s1 + $0x10c] sm:$0xf]
  %v87 = vld [vmem:[%s1 + $0x110] sm:$0xf]
  %v88 = vld [vmem:[%s1 + $0x114] sm:$0xf]
  %v89 = vld [vmem:[%s1 + $0x118] sm:$0xf]
  %v90 = vld [vmem:[%s1 + $0x11c] sm:$0xf]
  %v91 = vld [vmem:[%s1 + $0x120] sm:$0xf]
  %v92 = vld [vmem:[%s1 + $0x124] sm:$0xf]
  %v93 = vld [vmem:[%s1 + $0x128] sm:$0xf]
  %v94 = vld [vmem:[%s1 + $0x12c] sm:$0xf]
  %v95 = vld [vmem:[%s1 + $0x130] sm:$0xf]
  %v96 = vld [vmem:[%s1 + $0x134] sm:$0xf]
  %v97 = vld [vmem:[%s1 + $0x138] sm:$0xf]
  %v98 = vld [vmem:[%s1 + $0x13c] sm:$0xf]
  %v99 = vld [vmem:[%s1 + $0x140] sm:$0xf]
  %v100 = vld [vmem:[%s1 + $0x144] sm:$0xf]
  %v101 = vld [vmem:[%s1 + $0x148] sm:$0xf]
  %v102 = vld [vmem:[%s1 + $0x14c] sm:$0xf]
  %v103 = vld [vmem:[%s1 + $0x150] sm:$0xf]
  %v104 = vld [vmem:[%s1 + $0x154] sm:$0xf]
  %v105 = vld [vmem:[%s1 + $0x158] sm:$0xf]
  %v106 = vld [vmem:[%s1 + $0x15c] sm:$0xf]
  %v107 = vld [vmem:[%s1 + $0x160] sm:$0xf]
  %v108 = vld [vmem:[%s1 + $0x164] sm:$0xf]
  %v109 = vld [vmem:[%s1 + $0x168] sm:$0xf]
  %v110 = vld [vmem:[%s1 + $0x16c] sm:$0xf]
  %v111 = vld [vmem:[%s1 + $0x170] sm:$0xf]
  %v112 = vld [vmem:[%s1 + $0x174] sm:$0xf]
  %v113 = vld [vmem:[%s1 + $0x178] sm:$0xf]
  %v114 = vld [vmem:[%s1 + $0x17c] sm:$0xf]
  %v115 = vld [vmem:[%s1 + $0x180] sm:$0xf]
  %v116 = vld [vmem:[%s1 + $0x184] sm:$0xf]
  %v117 = vld [vmem:[%s1 + $0x188] sm:$0xf]
  %v118 = vld [vmem:[%s1 + $0x18c] sm:$0xf]
  %v119 = vld [vmem:[%s2] sm:$0x1]
  %v120 = vlaneseq
  %v121 = vshrl.u32 %v120, 7
  %v122 = vsub.s32 0, %v121
  %v123 = vrot.slane %v119, %v122
  %v125 = vcombine.high %v18, %v18
  %v127 = vunpack.c.l.s4 1966171168
  %v128 = vunpack.c.0.s8 %v127
  %v129 = vlaneseq
  %v130 = vshrl.u32 %v129, 7
  %v131 = vsub.s32 %v128, %v130
  %v132 = vrot.slane %v18, %v131
  %v134 = vunpack.c.l.s4 1966171168
  %v135 = vunpack.c.0.s8 %v134
  %v136 = vlaneseq
  %v137 = vshrl.u32 %v136, 7
  %v138 = vsub.s32 %v135, %v137
  %v139 = vrot.slane %v125, %v138
  %v140 = vcombine.high %v132, %v132
  %v141 = vcombine.high %v139, %v139
  %v143 = vunpack.c.l.s4 1966171168
  %v144 = vunpack.c.0.s8 %v143
  %v145 = vlaneseq
  %v146 = vshrl.u32 %v145, 7
  %v147 = vsub.s32 %v144, %v146
  %v148 = vrot.slane %v132, %v147
  %v150 = vunpack.c.l.s4 1966171168
  %v151 = vunpack.c.0.s8 %v150
  %v152 = vlaneseq
  %v153 = vshrl.u32 %v152, 7
  %v154 = vsub.s32 %v151, %v153
  %v155 = vrot.slane %v139, %v154
  %v157 = vunpack.c.l.s4 1966171168
  %v158 = vunpack.c.0.s8 %v157
  %v159 = vlaneseq
  %v160 = vshrl.u32 %v159, 7
  %v161 = vsub.s32 %v158, %v160
  %v162 = vrot.slane %v140, %v161
  %v164 = vunpack.c.l.s4 1966171168
  %v165 = vunpack.c.0.s8 %v164
  %v166 = vlaneseq
  %v167 = vshrl.u32 %v166, 7
  %v168 = vsub.s32 %v165, %v167
  %v169 = vrot.slane %v141, %v168
  %v170 = vcombine.high %v148, %v148
  %v171 = vcombine.high %v155, %v155
  %v172 = vcombine.high %v162, %v162
  %v279 = vunpack.c.l.b16 %v19
  %v280 = vunpack.c.l.b16 %v20
  %v281 = vunpack.c.l.b16 %v21
  %v282 = vunpack.c.l.b16 %v22
  %v283 = vunpack.c.l.b16 %v23
  %v284 = vunpack.c.l.b16 %v24
  %v285 = vunpack.c.l.b16 %v25
  %v286 = vunpack.c.l.b16 %v26
  %v287 = vunpack.c.l.b16 %v27
  %v288 = vunpack.c.l.b16 %v28
  %v289 = vunpack.c.l.b16 %v29
  %v290 = vunpack.c.l.b16 %v30
  %v291 = vunpack.c.l.b16 %v31
  %v292 = vunpack.c.l.b16 %v32
  %v293 = vunpack.c.l.b16 %v33
  %v294 = vunpack.c.l.b16 %v34
  %v295 = vunpack.c.l.b16 %v35
  %v296 = vunpack.c.l.b16 %v36
  %v297 = vunpack.c.l.b16 %v37
  %v298 = vunpack.c.l.b16 %v38
  %v299 = vunpack.c.l.b16 %v39
  %v300 = vunpack.c.l.b16 %v40
  %v301 = vunpack.c.l.b16 %v41
  %v302 = vunpack.c.l.b16 %v42
  %v303 = vunpack.c.l.b16 %v43
  %v304 = vunpack.c.l.b16 %v44
  %v305 = vunpack.c.l.b16 %v45
  %v306 = vunpack.c.l.b16 %v46
  %v307 = vunpack.c.l.b16 %v47
  %v308 = vunpack.c.l.b16 %v48
  %v309 = vunpack.c.l.b16 %v49
  %v310 = vunpack.c.l.b16 %v50
  %v311 = vunpack.c.l.b16 %v51
  %v312 = vunpack.c.l.b16 %v52
  %v313 = vunpack.c.l.b16 %v53
  %v314 = vunpack.c.l.b16 %v54
  %v315 = vunpack.c.l.b16 %v55
  %v316 = vunpack.c.l.b16 %v56
  %v317 = vunpack.c.l.b16 %v57
  %v318 = vunpack.c.l.b16 %v58
  %v319 = vunpack.c.l.b16 %v59
  %v320 = vunpack.c.l.b16 %v60
  %v321 = vunpack.c.l.b16 %v61
  %v322 = vunpack.c.l.b16 %v62
  %v323 = vunpack.c.l.b16 %v63
  %v324 = vunpack.c.l.b16 %v64
  %v325 = vunpack.c.l.b16 %v65
  %v326 = vunpack.c.l.b16 %v66
  %v327 = vunpack.c.l.b16 %v67
  %v328 = vunpack.c.l.b16 %v68
  %v329 = vunpack.c.l.b16 %v69
  %v330 = vunpack.c.l.b16 %v70
  %v331 = vunpack.c.l.b16 %v71
  %v332 = vunpack.c.l.b16 %v72
  %v333 = vunpack.c.l.b16 %v73
  %v334 = vunpack.c.l.b16 %v74
  %v335 = vunpack.c.l.b16 %v75
  %v336 = vunpack.c.l.b16 %v76
  %v337 = vunpack.c.l.b16 %v77
  %v338 = vunpack.c.l.b16 %v78
  %v339 = vunpack.c.l.b16 %v79
  %v340 = vunpack.c.l.b16 %v80
  %v341 = vunpack.c.l.b16 %v81
  %v342 = vunpack.c.l.b16 %v82
  %v343 = vunpack.c.l.b16 %v83
  %v344 = vunpack.c.l.b16 %v84
  %v345 = vunpack.c.l.b16 %v85
  %v346 = vunpack.c.l.b16 %v86
  %v347 = vunpack.c.l.b16 %v87
  %v348 = vunpack.c.l.b16 %v88
  %v349 = vunpack.c.l.b16 %v89
  %v350 = vunpack.c.l.b16 %v90
  %v351 = vunpack.c.l.b16 %v91
  %v352 = vunpack.c.l.b16 %v92
  %v353 = vunpack.c.l.b16 %v93
  %v354 = vunpack.c.l.b16 %v94
  %v355 = vunpack.c.l.b16 %v95
  %v356 = vunpack.c.l.b16 %v96
  %v357 = vunpack.c.l.b16 %v97
  %v358 = vunpack.c.l.b16 %v98
  %v359 = vunpack.c.l.b16 %v99
  %v360 = vunpack.c.l.b16 %v100
  %v361 = vunpack.c.l.b16 %v101
  %v362 = vunpack.c.l.b16 %v102
  %v363 = vunpack.c.l.b16 %v103
  %v364 = vunpack.c.l.b16 %v104
  %v365 = vunpack.c.l.b16 %v105
  %v366 = vunpack.c.l.b16 %v106
  %v367 = vunpack.c.l.b16 %v107
  %v368 = vunpack.c.l.b16 %v108
  %v369 = vunpack.c.l.b16 %v109
  %v370 = vunpack.c.l.b16 %v110
  %v371 = vunpack.c.l.b16 %v111
  %v372 = vunpack.c.l.b16 %v112
  %v373 = vunpack.c.l.b16 %v113
  %v374 = vunpack.c.l.b16 %v114
  %v375 = vunpack.c.l.b16 %v115
  %v376 = vunpack.c.l.b16 %v116
  %v377 = vunpack.c.l.b16 %v117
  %v378 = vunpack.c.l.b16 %v118
  %v379 = vpack.c.b16 %v280, %v279
  %v380 = vpack.c.b16 %v282, %v281
  %v381 = vpack.c.b16 %v284, %v283
  %v382 = vpack.c.b16 %v286, %v285
  %v383 = vpack.c.b16 %v288, %v287
  %v384 = vpack.c.b16 %v290, %v289
  %v385 = vpack.c.b16 %v292, %v291
  %v386 = vpack.c.b16 %v294, %v293
  %v387 = vpack.c.b16 %v296, %v295
  %v388 = vpack.c.b16 %v298, %v297
  %v389 = vpack.c.b16 %v300, %v299
  %v390 = vpack.c.b16 %v302, %v301
  %v391 = vpack.c.b16 %v304, %v303
  %v392 = vpack.c.b16 %v306, %v305
  %v393 = vpack.c.b16 %v308, %v307
  %v394 = vpack.c.b16 %v310, %v309
  %v395 = vpack.c.b16 %v312, %v311
  %v396 = vpack.c.b16 %v314, %v313
  %v397 = vpack.c.b16 %v316, %v315
  %v398 = vpack.c.b16 %v318, %v317
  %v399 = vpack.c.b16 %v320, %v319
  %v400 = vpack.c.b16 %v322, %v321
  %v401 = vpack.c.b16 %v324, %v323
  %v402 = vpack.c.b16 %v326, %v325
  %v403 = vpack.c.b16 %v328, %v327
  %v404 = vpack.c.b16 %v330, %v329
  %v405 = vpack.c.b16 %v332, %v331
  %v406 = vpack.c.b16 %v334, %v333
  %v407 = vpack.c.b16 %v336, %v335
  %v408 = vpack.c.b16 %v338, %v337
  %v409 = vpack.c.b16 %v340, %v339
  %v410 = vpack.c.b16 %v342, %v341
  %v411 = vpack.c.b16 %v344, %v343
  %v412 = vpack.c.b16 %v346, %v345
  %v413 = vpack.c.b16 %v348, %v347
  %v414 = vpack.c.b16 %v350, %v349
  %v415 = vpack.c.b16 %v352, %v351
  %v416 = vpack.c.b16 %v354, %v353
  %v417 = vpack.c.b16 %v356, %v355
  %v418 = vpack.c.b16 %v358, %v357
  %v419 = vpack.c.b16 %v360, %v359
  %v420 = vpack.c.b16 %v362, %v361
  %v421 = vpack.c.b16 %v364, %v363
  %v422 = vpack.c.b16 %v366, %v365
  %v423 = vpack.c.b16 %v368, %v367
  %v424 = vpack.c.b16 %v370, %v369
  %v425 = vpack.c.b16 %v372, %v371
  %v426 = vpack.c.b16 %v374, %v373
  %v427 = vpack.c.b16 %v376, %v375
  %v428 = vpack.c.b16 %v378, %v377
  %vm479 = vcmask 261120
  %v481 = vsel %vm479, %v171, 0
  %483 = vmatprep.subr.bf16.mxu0 0
  %484 = vmatpush1.bf16.msra.mxu0 %v379
  %485 = vmatprep.subr.bf16.mxu0 0
  %486 = vmatpush1.bf16.msra.mxu0 %v380
  %487 = vmatprep.subr.bf16.mxu0 0
  %488 = vmatpush1.bf16.msra.mxu0 %v381
  %489 = vmatprep.subr.bf16.mxu0 0
  %490 = vmatpush1.bf16.msra.mxu0 %v382
  %491 = vmatprep.subr.bf16.mxu0 0
  %492 = vmatpush1.bf16.msra.mxu0 %v383
  %493 = vmatprep.subr.bf16.mxu0 0
  %494 = vmatpush1.bf16.msra.mxu0 %v384
  %495 = vmatprep.subr.bf16.mxu0 0
  %496 = vmatpush1.bf16.msra.mxu0 %v385
  %497 = vmatprep.subr.bf16.mxu0 0
  %498 = vmatpush1.bf16.msra.mxu0 %v386
  %499 = vmatprep.subr.bf16.mxu0 0
  %500 = vmatpush1.bf16.msra.mxu0 %v387
  %501 = vmatprep.subr.bf16.mxu0 0
  %502 = vmatpush1.bf16.msra.mxu0 %v388
  %503 = vmatprep.subr.bf16.mxu0 0
  %504 = vmatpush1.bf16.msra.mxu0 %v389
  %505 = vmatprep.subr.bf16.mxu0 0
  %506 = vmatpush1.bf16.msra.mxu0 %v390
  %507 = vmatprep.subr.bf16.mxu0 0
  %508 = vmatpush1.bf16.msra.mxu0 %v391
  %509 = vmatprep.subr.bf16.mxu0 0
  %510 = vmatpush1.bf16.msra.mxu0 %v392
  %511 = vmatprep.subr.bf16.mxu0 0
  %512 = vmatpush1.bf16.msra.mxu0 %v393
  %513 = vmatprep.subr.bf16.mxu0 0
  %514 = vmatpush1.bf16.msra.mxu0 %v394
  %515 = vmatprep.mubr.bf16.mxu0 %v162
  %516 = vmatmul.mubr.bf16.gmra.mrb[0].mxu0 %v148
  %v517 = vpop.f32.mrb[0].mxu0
  %v518 = vadd.f32 %v123, %v517
  %v519 = vpop.f32.mrb[0].mxu0
  %v520 = vpop.f32.mrb[0].mxu0
  %v521 = vpop.f32.mrb[0].mxu0
  %522 = vdwg.mxu0
  %523 = vmatprep.subr.bf16.mxu0 0
  %524 = vmatpush1.bf16.msra.mxu0 %v395
  %525 = vmatprep.subr.bf16.mxu0 0
  %526 = vmatpush1.bf16.msra.mxu0 %v396
  %527 = vmatprep.subr.bf16.mxu0 0
  %528 = vmatpush1.bf16.msra.mxu0 %v397
  %529 = vmatprep.subr.bf16.mxu0 0
  %530 = vmatpush1.bf16.msra.mxu0 %v398
  %531 = vmatprep.subr.bf16.mxu0 0
  %532 = vmatpush1.bf16.msra.mxu0 %v399
  %533 = vmatprep.subr.bf16.mxu0 0
  %534 = vmatpush1.bf16.msra.mxu0 %v400
  %535 = vmatprep.subr.bf16.mxu0 0
  %536 = vmatpush1.bf16.msra.mxu0 %v401
  %537 = vmatprep.subr.bf16.mxu0 0
  %538 = vmatpush1.bf16.msra.mxu0 %v402
  %539 = vmatprep.subr.bf16.mxu0 0
  %540 = vmatpush1.bf16.msra.mxu0 %v403
  %541 = vmatprep.subr.bf16.mxu0 0
  %542 = vmatpush1.bf16.msra.mxu0 %v404
  %543 = vmatprep.subr.bf16.mxu0 0
  %544 = vmatpush1.bf16.msra.mxu0 %v405
  %545 = vmatprep.subr.bf16.mxu0 0
  %546 = vmatpush1.bf16.msra.mxu0 %v406
  %547 = vmatprep.subr.bf16.mxu0 0
  %548 = vmatpush1.bf16.msra.mxu0 %v407
  %549 = vmatprep.subr.bf16.mxu0 0
  %550 = vmatpush1.bf16.msra.mxu0 %v408
  %551 = vmatprep.subr.bf16.mxu0 0
  %552 = vmatpush1.bf16.msra.mxu0 %v409
  %553 = vmatprep.subr.bf16.mxu0 0
  %554 = vmatpush1.bf16.msra.mxu0 %v410
  %555 = vmatprep.mubr.bf16.mxu0 %v172
  %556 = vmatmul.mubr.bf16.gmra.mrb[0].mxu0 %v170
  %v557 = vpop.f32.mrb[0].mxu0
  %v558 = vadd.f32 %v518, %v557
  %v559 = vpop.f32.mrb[0].mxu0
  %v560 = vpop.f32.mrb[0].mxu0
  %v561 = vpop.f32.mrb[0].mxu0
  %562 = vdwg.mxu0
  %563 = vmatprep.subr.bf16.mxu0 0
  %564 = vmatpush1.bf16.msra.mxu0 %v411
  %565 = vmatprep.subr.bf16.mxu0 0
  %566 = vmatpush1.bf16.msra.mxu0 %v412
  %567 = vmatprep.subr.bf16.mxu0 0
  %568 = vmatpush1.bf16.msra.mxu0 %v413
  %569 = vmatprep.subr.bf16.mxu0 0
  %570 = vmatpush1.bf16.msra.mxu0 %v414
  %571 = vmatprep.subr.bf16.mxu0 0
  %572 = vmatpush1.bf16.msra.mxu0 %v415
  %573 = vmatprep.subr.bf16.mxu0 0
  %574 = vmatpush1.bf16.msra.mxu0 %v416
  %575 = vmatprep.subr.bf16.mxu0 0
  %576 = vmatpush1.bf16.msra.mxu0 %v417
  %577 = vmatprep.subr.bf16.mxu0 0
  %578 = vmatpush1.bf16.msra.mxu0 %v418
  %579 = vmatprep.subr.bf16.mxu0 0
  %580 = vmatpush1.bf16.msra.mxu0 %v419
  %581 = vmatprep.subr.bf16.mxu0 0
  %582 = vmatpush1.bf16.msra.mxu0 %v420
  %583 = vmatprep.subr.bf16.mxu0 0
  %584 = vmatpush1.bf16.msra.mxu0 %v421
  %585 = vmatprep.subr.bf16.mxu0 0
  %586 = vmatpush1.bf16.msra.mxu0 %v422
  %587 = vmatprep.subr.bf16.mxu0 0
  %588 = vmatpush1.bf16.msra.mxu0 %v423
  %589 = vmatprep.subr.bf16.mxu0 0
  %590 = vmatpush1.bf16.msra.mxu0 %v424
  %591 = vmatprep.subr.bf16.mxu0 0
  %592 = vmatpush1.bf16.msra.mxu0 %v425
  %593 = vmatprep.subr.bf16.mxu0 0
  %594 = vmatpush1.bf16.msra.mxu0 %v426
  %595 = vmatprep.mubr.bf16.mxu0 %v169
  %596 = vmatmul.mubr.bf16.gmra.mrb[0].mxu0 %v155
  %v597 = vpop.f32.mrb[0].mxu0
  %v598 = vadd.f32 %v558, %v597
  %v599 = vpop.f32.mrb[0].mxu0
  %v600 = vpop.f32.mrb[0].mxu0
  %v601 = vpop.f32.mrb[0].mxu0
  %602 = vdwg.mxu0
  %603 = vmatprep.subr.bf16.mxu0 0
  %604 = vmatpush1.bf16.msra.mxu0 %v427
  %605 = vmatprep.subr.bf16.mxu0 0
  %606 = vmatpush1.bf16.msra.mxu0 %v428
  %607 = vmatprep.subr.bf16.mxu0 0
  %608 = vmatpush1.bf16.msra.mxu0 0
  %609 = vmatprep.subr.bf16.mxu0 0
  %610 = vmatpush1.bf16.msra.mxu0 0
  %611 = vmatprep.subr.bf16.mxu0 0
  %612 = vmatpush1.bf16.msra.mxu0 0
  %613 = vmatprep.subr.bf16.mxu0 0
  %614 = vmatpush1.bf16.msra.mxu0 0
  %615 = vmatprep.subr.bf16.mxu0 0
  %616 = vmatpush1.bf16.msra.mxu0 0
  %617 = vmatprep.subr.bf16.mxu0 0
  %618 = vmatpush1.bf16.msra.mxu0 0
  %619 = vmatprep.subr.bf16.mxu0 0
  %620 = vmatpush1.bf16.msra.mxu0 0
  %621 = vmatprep.subr.bf16.mxu0 0
  %622 = vmatpush1.bf16.msra.mxu0 0
  %623 = vmatprep.subr.bf16.mxu0 0
  %624 = vmatpush1.bf16.msra.mxu0 0
  %625 = vmatprep.subr.bf16.mxu0 0
  %626 = vmatpush1.bf16.msra.mxu0 0
  %627 = vmatprep.subr.bf16.mxu0 0
  %628 = vmatpush1.bf16.msra.mxu0 0
  %629 = vmatprep.subr.bf16.mxu0 0
  %630 = vmatpush1.bf16.msra.mxu0 0
  %631 = vmatprep.subr.bf16.mxu0 0
  %632 = vmatpush1.bf16.msra.mxu0 0
  %633 = vmatprep.subr.bf16.mxu0 0
  %634 = vmatpush1.bf16.msra.mxu0 0
  %635 = vmatprep.mubr.bf16.mxu0 0
  %636 = vmatmul.mubr.bf16.gmra.mrb[0].mxu0 %v481
  %v637 = vpop.f32.mrb[0].mxu0
  %v638 = vadd.f32 %v598, %v637
  %v639 = vpop.f32.mrb[0].mxu0
  %v640 = vpop.f32.mrb[0].mxu0
  %v641 = vpop.f32.mrb[0].mxu0
  %642 = vdwg.mxu0
  %vm643 = vcmask 1041408
  %v644 = vsel %vm643, %v638, 0.0
  %v645 = vrot.slane %v644, 4
  %v646 = vadd.f32 %v644, %v645
  %v647 = vrot.slane %v646, 2
  %v648 = vadd.f32 %v646, %v647
  %v649 = vrot.slane %v648, 1
  %v650 = vadd.f32 %v648, %v649
  %v651 = vmul.f32 %v650, 0.5
  %v652 = vmul.f32 %v638, %v638
  %v653 = vsel %vm643, %v652, 0.0
  %v654 = vrot.slane %v653, 4
  %v655 = vadd.f32 %v653, %v654
  %v656 = vrot.slane %v655, 2
  %v657 = vadd.f32 %v655, %v656
  %v658 = vrot.slane %v657, 1
  %v659 = vadd.f32 %v657, %v658
  %v660 = vmul.f32 %v659, 0.5
  %v661 = vmul.f32 %v651, %v651
  %v662 = vsub.f32 %v660, %v661
  %v663 = vmax.f32 %v662, 0.0
  %v664 = vld [vmem:[%s2 + $0x1] sm:$0x1]
  %v665 = vadd.f32 %v663, 1e-05
  %v666 = vrsqrt.pop %v665
  %v667 = vmul.f32 %v664, %v666
  %v668 = vld [vmem:[%s2 + $0x2] sm:$0x1]
  %v669 = vmul.f32 %v651, %v667
  %v670 = vsub.f32 %v668, %v669
  %v671 = vlaneseq
  %v672 = vshrl.u32 %v671, 7
  %v673 = vsub.s32 0, %v672
  %v674 = vrot.slane %v667, %v673
  %v675 = vmul.f32 %v638, %v674
  %v676 = vlaneseq
  %v677 = vshrl.u32 %v676, 7
  %v678 = vsub.s32 0, %v677
  %v679 = vrot.slane %v670, %v678
  %v680 = vadd.f32 %v675, %v679
  %vm681 = vcmp.gt.f32.partialorder %v680, 0.0
  %v682 = vmul.f32 %v680, 0.2
  %v683 = vsel %vm681, %v680, %v682
  %v684 = vpack.c.bf16 %v683, %v683
  %v685 = vld [vmem:[%s3] sm:$0xf]
  %v686 = vld [vmem:[%s3 + $0x4] sm:$0xf]
  %v687 = vld [vmem:[%s3 + $0x8] sm:$0xf]
  %v688 = vld [vmem:[%s3 + $0xc] sm:$0xf]
  %v689 = vld [vmem:[%s3 + $0x10] sm:$0xf]
  %v690 = vld [vmem:[%s3 + $0x14] sm:$0xf]
  %v691 = vld [vmem:[%s3 + $0x18] sm:$0xf]
  %v692 = vld [vmem:[%s3 + $0x1c] sm:$0xf]
  %v693 = vld [vmem:[%s3 + $0x20] sm:$0xf]
  %v694 = vld [vmem:[%s3 + $0x24] sm:$0xf]
  %v695 = vld [vmem:[%s3 + $0x28] sm:$0xf]
  %v696 = vld [vmem:[%s3 + $0x2c] sm:$0xf]
  %v697 = vld [vmem:[%s3 + $0x30] sm:$0xf]
  %v698 = vld [vmem:[%s3 + $0x34] sm:$0xf]
  %v699 = vld [vmem:[%s3 + $0x38] sm:$0xf]
  %v700 = vld [vmem:[%s3 + $0x3c] sm:$0xf]
  %v701 = vld [vmem:[%s2 + $0x3] sm:$0x1]
  %v702 = vlaneseq
  %v703 = vshrl.u32 %v702, 7
  %v704 = vsub.s32 0, %v703
  %v705 = vrot.slane %v701, %v704
  %v722 = vunpack.c.l.b16 %v685
  %v723 = vunpack.c.l.b16 %v686
  %v724 = vunpack.c.l.b16 %v687
  %v725 = vunpack.c.l.b16 %v688
  %v726 = vunpack.c.l.b16 %v689
  %v727 = vunpack.c.l.b16 %v690
  %v728 = vunpack.c.l.b16 %v691
  %v729 = vunpack.c.l.b16 %v692
  %v730 = vunpack.c.l.b16 %v693
  %v731 = vunpack.c.l.b16 %v694
  %v732 = vunpack.c.l.b16 %v695
  %v733 = vunpack.c.l.b16 %v696
  %v734 = vunpack.c.l.b16 %v697
  %v735 = vunpack.c.l.b16 %v698
  %v736 = vunpack.c.l.b16 %v699
  %v737 = vunpack.c.l.b16 %v700
  %v738 = vpack.c.b16 %v723, %v722
  %v739 = vpack.c.b16 %v725, %v724
  %v740 = vpack.c.b16 %v727, %v726
  %v741 = vpack.c.b16 %v729, %v728
  %v742 = vpack.c.b16 %v731, %v730
  %v743 = vpack.c.b16 %v733, %v732
  %v744 = vpack.c.b16 %v735, %v734
  %v745 = vpack.c.b16 %v737, %v736
  %754 = vmatprep.subr.bf16.mxu0 0
  %755 = vmatpush1.bf16.msra.mxu0 %v738
  %756 = vmatprep.subr.bf16.mxu0 0
  %757 = vmatpush1.bf16.msra.mxu0 %v739
  %758 = vmatprep.subr.bf16.mxu0 0
  %759 = vmatpush1.bf16.msra.mxu0 %v740
  %760 = vmatprep.subr.bf16.mxu0 0
  %761 = vmatpush1.bf16.msra.mxu0 %v741
  %762 = vmatprep.subr.bf16.mxu0 0
  %763 = vmatpush1.bf16.msra.mxu0 %v742
  %764 = vmatprep.subr.bf16.mxu0 0
  %765 = vmatpush1.bf16.msra.mxu0 %v743
  %766 = vmatprep.subr.bf16.mxu0 0
  %767 = vmatpush1.bf16.msra.mxu0 %v744
  %768 = vmatprep.subr.bf16.mxu0 0
  %769 = vmatpush1.bf16.msra.mxu0 %v745
  %770 = vmatprep.subr.bf16.mxu0 0
  %771 = vmatpush1.bf16.msra.mxu0 0
  %772 = vmatprep.subr.bf16.mxu0 0
  %773 = vmatpush1.bf16.msra.mxu0 0
  %774 = vmatprep.subr.bf16.mxu0 0
  %775 = vmatpush1.bf16.msra.mxu0 0
  %776 = vmatprep.subr.bf16.mxu0 0
  %777 = vmatpush1.bf16.msra.mxu0 0
  %778 = vmatprep.subr.bf16.mxu0 0
  %779 = vmatpush1.bf16.msra.mxu0 0
  %780 = vmatprep.subr.bf16.mxu0 0
  %781 = vmatpush1.bf16.msra.mxu0 0
  %782 = vmatprep.subr.bf16.mxu0 0
  %783 = vmatpush1.bf16.msra.mxu0 0
  %784 = vmatprep.subr.bf16.mxu0 0
  %785 = vmatpush1.bf16.msra.mxu0 0
  %786 = vmatprep.mubr.bf16.mxu0 0
  %787 = vmatmul.mubr.bf16.gmra.mrb[0].mxu0 %v684
  %v788 = vpop.f32.mrb[0].mxu0
  %v789 = vadd.f32 %v705, %v788
  %v790 = vpop.f32.mrb[0].mxu0
  %v791 = vpop.f32.mrb[0].mxu0
  %v792 = vpop.f32.mrb[0].mxu0
  %793 = vdwg.mxu0
  %794 = vst [vmem:[%s4] sm:$0x3] %v789
  // Predicated region
  $region18: #{discriminator_forward.5} parent=0 // pred_check
    _
  $region19: #{discriminator_forward.5} parent=0 // pred_check_branch
    %796 = sbr.rel (0) target = $region21
  $region20: #{discriminator_forward.5} parent=0 // pred_region
    _
  $region21: #{discriminator_forward.5} parent=0 // pred_fallthru
    _
  // Predicated region
  $region22: #{discriminator_forward.5} parent=0 // pred_check
    _
  $region23: #{discriminator_forward.5} parent=0 // pred_check_branch
    %798 = sbr.rel (0) target = $region25
  $region24: #{discriminator_forward.5} parent=0 // pred_region
    _
  $region25: #{discriminator_forward.5} parent=0 // pred_fallthru
    _

</llo_original>
